<compile_context>
chip_gen: v6e
topology: v6e:2x2x1
jax: 0.10.0
libtpu: 0.0.40
codegen_flags: <defaults>
</compile_context>

<pallas_src>
import functools

import jax
import jax.numpy as jnp
from jax.experimental import pallas as pl
from jax.experimental.pallas import tpu as pltpu


# ---------------------------------------------------------------------------
# Kernel 1: small C (<= 8)  --  dense pixel layout, pure VPU path.
# Blocks: x_s / out -> (1, C, rows, 128); weights live in SMEM as flat f32.
# ---------------------------------------------------------------------------
def _fusion_kernel_dense(*refs, C, S):
    x_refs = refs[:S]
    w1_ref, b1_ref, w2_ref, b2_ref, ww_ref, bw_ref, o_ref = refs[S:]

    # One dense (rows, 128) slab per (scale, channel): fully packed vregs.
    xs = [[x_refs[s][0, i].astype(jnp.float32) for i in range(C)]
          for s in range(S)]

    # sa_conv1 (1x1, S*C -> C) + ReLU as unrolled scalar-broadcast FMAs.
    hs = []
    for o in range(C):
        acc = None
        for s in range(S):
            base = s * C * C + o * C            # w1[s, o, i]
            for i in range(C):
                t = w1_ref[base + i] * xs[s][i]
                acc = t if acc is None else acc + t
        hs.append(jnp.maximum(acc + b1_ref[o], 0.0))

    # sa_conv2 (1x1, C -> 1) + sigmoid -> per-pixel spatial mask.
    m = None
    for i in range(C):
        t = w2_ref[i] * hs[i]
        m = t if m is None else m + t
    mask = jax.nn.sigmoid(m + b2_ref[0])

    # weight_conv on masked feats; (mask*x) . W == mask * (x . W),
    # so the xm = x*mask temporary is never materialized.
    logits = []
    for o in range(S):
        acc = None
        for s in range(S):
            base = s * S * C + o * C            # ww[s, o, i]
            for i in range(C):
                t = ww_ref[base + i] * xs[s][i]
                acc = t if acc is None else acc + t
        logits.append(mask * acc + bw_ref[o])

    # softmax over the (tiny, unrolled) scale axis.
    mx = logits[0]
    for o in range(1, S):
        mx = jnp.maximum(mx, logits[o])
    es = [jnp.exp(l - mx) for l in logits]
    denom = es[0]
    for o in range(1, S):
        denom = denom + es[o]
    wmask = mask * pl.reciprocal(denom, approx=False)   # hoisted inv * mask
    attn = [e * wmask for e in es]

    # fused[c] = sum_s attn_s * (mask * x_s[c])
    for c in range(C):
        acc = attn[0] * xs[0][c]
        for s in range(1, S):
            acc = acc + attn[s] * xs[s][c]
        o_ref[0, c] = acc.astype(o_ref.dtype)


# ---------------------------------------------------------------------------
# Kernel 2: moderate/large C  --  fused K = S*C MXU matmuls.
# Blocks: x_s / out -> (1, C, TN); weights as small VMEM tiles.
# ---------------------------------------------------------------------------
def _fusion_kernel_mxu(*refs, C, S, matmul_dtype):
    x_refs = refs[:S]
    w1_ref, b1_ref, w2_ref, b2_ref, ww_ref, bw_ref, o_ref = refs[S:]

    xs = [x_refs[s][0] for s in range(S)]                        # (C, TN) each
    x_cat = jnp.concatenate(xs, axis=0).astype(matmul_dtype)     # (S*C, TN)

    # sa_conv1 + ReLU: one fused K = S*C matmul (bf16 operands, f32 accum).
    h = jnp.dot(w1_ref[...].astype(matmul_dtype), x_cat,
                preferred_element_type=jnp.float32) + b1_ref[...]
    h = jnp.maximum(h, 0.0)                                      # (C, TN) f32

    # sa_conv2 + sigmoid -> spatial mask (1, TN).
    m = jnp.dot(w2_ref[...].astype(matmul_dtype), h.astype(matmul_dtype),
                preferred_element_type=jnp.float32) + b2_ref[...]
    mask = jax.nn.sigmoid(m)

    # weight_conv on masked feats; (mask*x) @ W == mask * (x @ W).
    xw = jnp.dot(ww_ref[...].astype(matmul_dtype), x_cat,
                 preferred_element_type=jnp.float32)
    logits = mask * xw + bw_ref[...]                             # (S, TN)

    # softmax over scales: cross-sublane reduces go to the XLU slot.
    mx = jnp.max(logits, axis=0, keepdims=True)
    es = jnp.exp(logits - mx)
    denom = jnp.sum(es, axis=0, keepdims=True)
    wmask = mask * pl.reciprocal(denom, approx=False)            # hoisted inv*mask
    attn = es * wmask                                            # (S, TN)

    xf = [x.astype(jnp.float32) for x in xs]
    fused = attn[0:1, :] * xf[0]
    for s in range(1, S):
        fused = fused + attn[s:s + 1, :] * xf[s]
    o_ref[0] = fused.astype(o_ref.dtype)


# ---------------------------------------------------------------------------
# Generation-aware tile / VMEM budgeting.
# ---------------------------------------------------------------------------
def _vmem_limit_bytes():
    """Scoped-VMEM budget that respects v7x's 64 MiB/TC (v5e/v6e have 128)."""
    cap = 64 * 1024 * 1024                       # conservative default (v7x)
    try:
        info = pltpu.get_tpu_info()
        cap = int(getattr(info, "vmem_capacity_bytes", cap) or cap)
    except Exception:
        pass
    return min(int(cap * 0.75), 100 * 1024 * 1024)


def _pick_tile_hw(HW, B, C, S, io_itemsize, vmem_limit):
    """Largest pixel tile (multiple of 128, capped at 8192) whose
    double-buffered I/O + f32 working set fits a fraction of the VMEM budget,
    keeping >= 2 parallel grid steps so both v7x TensorCores get work."""
    per_px = ((S + 1) * 2 * C * io_itemsize      # double-buffered in/out DMA
              + (S + 2) * C * 4                  # in-kernel f32 working set
              + 8 * S * 4)                       # mask / logits / softmax rows
    tile = int(vmem_limit * 0.6) // max(per_px, 1)
    tile = max(128, (min(tile, 8192) // 128) * 128)
    if B < 2:                                    # keep >= 2 parallel grid steps
        hw128 = max(128, (HW // 128) * 128)
        tile = min(tile, max(128, ((hw128 // 2) // 128) * 128))
    return tile


# ---------------------------------------------------------------------------
# Wrapper.
# ---------------------------------------------------------------------------
def adaptive_scale_fusion(feats, params, *, io_dtype=jnp.float32,
                          matmul_dtype=jnp.bfloat16, tile_hw=None,
                          small_c_threshold=8):
    """feats: list of S arrays (B, C, H, W) float (NCHW, like PyTorch).

    io_dtype=jnp.bfloat16 halves HBM traffic (math stays f32 in-kernel);
    matmul_dtype controls MXU operand precision on the large-C path.
    """
    w1, b1, w2, b2, ww, bw = params
    S = len(feats)
    B, C, H, W = feats[0].shape
    HW = H * W
    io_itemsize = jnp.dtype(io_dtype).itemsize

    vmem_limit = _vmem_limit_bytes()
    if tile_hw is None:
        tile_hw = _pick_tile_hw(HW, B, C, S, io_itemsize, vmem_limit)
    tile_hw = max(128, (tile_hw // 128) * 128)

    cparams = pltpu.CompilerParams(
        dimension_semantics=("parallel", "parallel"),
        vmem_limit_bytes=vmem_limit)

    if C <= small_c_threshold:
        # -------- dense-pixel VPU path (small C) --------
        n128 = -(-HW // 128)
        rows = tile_hw // 128
        if n128 <= rows:
            rows, n_tiles = n128, 1
        else:
            rows = max(8, (rows // 8) * 8)       # (8,128) tiling when blocked
            n_tiles = -(-n128 // rows)
        hw_pad = n_tiles * rows * 128

        xs = [jnp.pad(f.reshape(B, C, HW).astype(io_dtype),
                      ((0, 0), (0, 0), (0, hw_pad - HW)))
                 .reshape(B, C, n_tiles * rows, 128)
              for f in feats]

        kernel = functools.partial(_fusion_kernel_dense, C=C, S=S)
        x_spec = pl.BlockSpec((1, C, rows, 128), lambda b, j: (b, 0, j, 0))
        smem = pl.BlockSpec(memory_space=pltpu.MemorySpace.SMEM)

        out = pl.pallas_call(
            kernel,
            out_shape=jax.ShapeDtypeStruct((B, C, n_tiles * rows, 128), io_dtype),
            grid=(B, n_tiles),
            in_specs=[x_spec] * S + [smem] * 6,
            out_specs=x_spec,
            compiler_params=cparams,
        )(*xs,
          w1.reshape(-1), b1.reshape(-1), w2.reshape(-1),
          b2.reshape(-1), ww.reshape(-1), bw.reshape(-1))

        out = out.reshape(B, C, hw_pad)[:, :, :HW]
    else:
        # -------- fused K = S*C MXU path (moderate/large C) --------
        if HW <= tile_hw:
            tile_px = -(-HW // 128) * 128
            n_tiles = 1
        else:
            tile_px = tile_hw
            n_tiles = -(-HW // tile_px)
        hw_pad = n_tiles * tile_px

        xs = [jnp.pad(f.reshape(B, C, HW).astype(io_dtype),
                      ((0, 0), (0, 0), (0, hw_pad - HW)))
              for f in feats]
        w1cat = jnp.concatenate([w1[s] for s in range(S)], axis=1)   # (C, S*C)
        wwcat = jnp.concatenate([ww[s] for s in range(S)], axis=1)   # (S, S*C)

        kernel = functools.partial(_fusion_kernel_mxu, C=C, S=S,
                                   matmul_dtype=matmul_dtype)
        x_spec = pl.BlockSpec((1, C, tile_px), lambda b, j: (b, 0, j))
        w_specs = [
            pl.BlockSpec((C, S * C), lambda b, j: (0, 0)),
            pl.BlockSpec((C, 1), lambda b, j: (0, 0)),
            pl.BlockSpec((1, C), lambda b, j: (0, 0)),
            pl.BlockSpec((1, 1), lambda b, j: (0, 0)),
            pl.BlockSpec((S, S * C), lambda b, j: (0, 0)),
            pl.BlockSpec((S, 1), lambda b, j: (0, 0)),
        ]

        out = pl.pallas_call(
            kernel,
            out_shape=jax.ShapeDtypeStruct((B, C, hw_pad), io_dtype),
            grid=(B, n_tiles),
            in_specs=[x_spec] * S + w_specs,
            out_specs=x_spec,
            compiler_params=cparams,
        )(*xs, w1cat, b1, w2, b2, wwcat, bw)

        out = out[:, :, :HW]

    return out.reshape(B, C, H, W)


# ---------------------------------------------------------------------------
# Pure-JAX reference mirroring the PyTorch forward (NCHW semantics).
# ---------------------------------------------------------------------------
def reference_jax(feats, params):
    w1, b1, w2, b2, ww, bw = params
    S = len(feats)
    stacked = jnp.concatenate(feats, axis=1)                       # (B, C*S, H, W)

    W1 = jnp.concatenate([w1[s] for s in range(S)], axis=1)        # (C, C*S)
    WW = jnp.concatenate([ww[s] for s in range(S)], axis=1)        # (S, C*S)

    def conv1x1(x, w, b):                                          # w: (Cout, Cin)
        return jnp.einsum('bihw,oi->bohw', x, w) + b.reshape(1, -1, 1, 1)

    h = jax.nn.relu(conv1x1(stacked, W1, b1.reshape(-1)))
    mask = jax.nn.sigmoid(conv1x1(h, w2, b2.reshape(-1)))          # (B, 1, H, W)
    feats_m = [f * mask for f in feats]
    stacked_m = jnp.concatenate(feats_m, axis=1)
    attn = jax.nn.softmax(conv1x1(stacked_m, WW, bw.reshape(-1)), axis=1)
    return sum(attn[:, i:i + 1] * feats_m[i] for i in range(len(feats)))


def init_params(key, in_channels, num_scales):
    """Deterministic parameter init, stored pre-split per scale:
       w1[s] == torch sa_conv1.weight[:, s*C:(s+1)*C, 0, 0]    (C, C)
       ww[s] == torch weight_conv.weight[:, s*C:(s+1)*C, 0, 0] (S, C)"""
    C, S = in_channels, num_scales
    CS = C * S
    ks = jax.random.split(key, 6)
    w1 = jax.random.normal(ks[0], (S, C, C), jnp.float32) * (1.0 / jnp.sqrt(CS))
    b1 = jax.random.normal(ks[1], (C, 1), jnp.float32) * 0.01
    w2 = jax.random.normal(ks[2], (1, C), jnp.float32) * (1.0 / jnp.sqrt(C))
    b2 = jax.random.normal(ks[3], (1, 1), jnp.float32) * 0.01
    ww = jax.random.normal(ks[4], (S, S, C), jnp.float32) * (1.0 / jnp.sqrt(CS))
    bw = jax.random.normal(ks[5], (S, 1), jnp.float32) * 0.01
    return (w1, b1, w2, b2, ww, bw)


if __name__ == "__main__":
    # ---- small-C config (matches the PyTorch demo) -> dense VPU path ----
    B, C, H, W = 2, 4, 16, 16
    S = 3
    key = jax.random.PRNGKey(0)
    kp, kf = jax.random.split(key)
    params = init_params(kp, C, S)
    fkeys = jax.random.split(kf, S)
    feats = [jax.random.normal(fkeys[i], (B, C, H, W), jnp.float32)
             for i in range(S)]

    out = jax.block_until_ready(adaptive_scale_fusion(feats, params))
    ref = jax.block_until_ready(reference_jax(feats, params))
    assert out.shape == (B, C, H, W)
    err = float(jnp.max(jnp.abs(out - ref)))
    assert jnp.allclose(out, ref, atol=1e-3, rtol=1e-3), f"max abs err {err}"

    # bf16-I/O variant (halves HBM traffic); looser tolerance for rounded inputs.
    out_bf = jax.block_until_ready(
        adaptive_scale_fusion(feats, params, io_dtype=jnp.bfloat16))
    assert out_bf.shape == (B, C, H, W)
    assert jnp.allclose(out_bf.astype(jnp.float32), ref, atol=5e-2, rtol=5e-2)

    # ---- larger-C config -> fused K=S*C MXU path (f32 parity + bf16 run) ----
    B2, C2, H2, W2, S2 = 2, 32, 16, 16, 2
    kp2, kf2 = jax.random.split(jax.random.PRNGKey(1))
    params2 = init_params(kp2, C2, S2)
    fkeys2 = jax.random.split(kf2, S2)
    feats2 = [jax.random.normal(fkeys2[i], (B2, C2, H2, W2), jnp.float32)
              for i in range(S2)]
    ref2 = jax.block_until_ready(reference_jax(feats2, params2))
    out2 = jax.block_until_ready(
        adaptive_scale_fusion(feats2, params2, matmul_dtype=jnp.float32))
    assert jnp.allclose(out2, ref2, atol=1e-3, rtol=1e-3)
    out2_bf = jax.block_until_ready(adaptive_scale_fusion(feats2, params2))
    assert jnp.allclose(out2_bf, ref2, atol=1e-1, rtol=1e-1)

    print("KERNEL_OK")
</pallas_src>

<mosaic_0001>
module attributes {stable_mosaic.version = 11 : i64} {
  func.func @_fusion_kernel_dense(%arg0: i32, %arg1: i32, %arg2: memref<1x4x2x128xf32, #tpu.memory_space<vmem>>, %arg3: memref<1x4x2x128xf32, #tpu.memory_space<vmem>>, %arg4: memref<1x4x2x128xf32, #tpu.memory_space<vmem>>, %arg5: memref<48xf32, #tpu.memory_space<smem>>, %arg6: memref<4xf32, #tpu.memory_space<smem>>, %arg7: memref<4xf32, #tpu.memory_space<smem>>, %arg8: memref<1xf32, #tpu.memory_space<smem>>, %arg9: memref<36xf32, #tpu.memory_space<smem>>, %arg10: memref<3xf32, #tpu.memory_space<smem>>, %arg11: memref<1x4x2x128xf32, #tpu.memory_space<vmem>>) attributes {dimension_semantics = [#tpu.dimension_semantics<parallel>, #tpu.dimension_semantics<parallel>], iteration_bounds = array<i64: 2, 1>, scalar_prefetch = 0 : i64, scratch_operands = 0 : i64, tpu.core_type = #tpu.core_type<tc>, window_params = [{transform_indices = @transform_0, window_bounds = array<i64: 1, 4, 2, 128>}, {transform_indices = @transform_1, window_bounds = array<i64: 1, 4, 2, 128>}, {transform_indices = @transform_2, window_bounds = array<i64: 1, 4, 2, 128>}, {transform_indices = @transform_3, window_bounds = array<i64: 48>}, {transform_indices = @transform_4, window_bounds = array<i64: 4>}, {transform_indices = @transform_5, window_bounds = array<i64: 4>}, {transform_indices = @transform_6, window_bounds = array<i64: 1>}, {transform_indices = @transform_7, window_bounds = array<i64: 36>}, {transform_indices = @transform_8, window_bounds = array<i64: 3>}, {transform_indices = @transform_9, window_bounds = array<i64: 1, 4, 2, 128>}]} {
    %c0 = arith.constant 0 : index
    %c0_0 = arith.constant 0 : index
    %c0_1 = arith.constant 0 : index
    %c0_2 = arith.constant 0 : index
    %0 = vector.load %arg2[%c0, %c0_0, %c0_1, %c0_2] : memref<1x4x2x128xf32, #tpu.memory_space<vmem>>, vector<1x1x2x128xf32>
    %1 = vector.shape_cast %0 : vector<1x1x2x128xf32> to vector<2x128xf32>
    %c0_3 = arith.constant 0 : index
    %c1 = arith.constant 1 : index
    %c0_4 = arith.constant 0 : index
    %c0_5 = arith.constant 0 : index
    %2 = vector.load %arg2[%c0_3, %c1, %c0_4, %c0_5] : memref<1x4x2x128xf32, #tpu.memory_space<vmem>>, vector<1x1x2x128xf32>
    %3 = vector.shape_cast %2 : vector<1x1x2x128xf32> to vector<2x128xf32>
    %c0_6 = arith.constant 0 : index
    %c2 = arith.constant 2 : index
    %c0_7 = arith.constant 0 : index
    %c0_8 = arith.constant 0 : index
    %4 = vector.load %arg2[%c0_6, %c2, %c0_7, %c0_8] : memref<1x4x2x128xf32, #tpu.memory_space<vmem>>, vector<1x1x2x128xf32>
    %5 = vector.shape_cast %4 : vector<1x1x2x128xf32> to vector<2x128xf32>
    %c0_9 = arith.constant 0 : index
    %c3 = arith.constant 3 : index
    %c0_10 = arith.constant 0 : index
    %c0_11 = arith.constant 0 : index
    %6 = vector.load %arg2[%c0_9, %c3, %c0_10, %c0_11] : memref<1x4x2x128xf32, #tpu.memory_space<vmem>>, vector<1x1x2x128xf32>
    %7 = vector.shape_cast %6 : vector<1x1x2x128xf32> to vector<2x128xf32>
    %c0_12 = arith.constant 0 : index
    %c0_13 = arith.constant 0 : index
    %c0_14 = arith.constant 0 : index
    %c0_15 = arith.constant 0 : index
    %8 = vector.load %arg3[%c0_12, %c0_13, %c0_14, %c0_15] : memref<1x4x2x128xf32, #tpu.memory_space<vmem>>, vector<1x1x2x128xf32>
    %9 = vector.shape_cast %8 : vector<1x1x2x128xf32> to vector<2x128xf32>
    %c0_16 = arith.constant 0 : index
    %c1_17 = arith.constant 1 : index
    %c0_18 = arith.constant 0 : index
    %c0_19 = arith.constant 0 : index
    %10 = vector.load %arg3[%c0_16, %c1_17, %c0_18, %c0_19] : memref<1x4x2x128xf32, #tpu.memory_space<vmem>>, vector<1x1x2x128xf32>
    %11 = vector.shape_cast %10 : vector<1x1x2x128xf32> to vector<2x128xf32>
    %c0_20 = arith.constant 0 : index
    %c2_21 = arith.constant 2 : index
    %c0_22 = arith.constant 0 : index
    %c0_23 = arith.constant 0 : index
    %12 = vector.load %arg3[%c0_20, %c2_21, %c0_22, %c0_23] : memref<1x4x2x128xf32, #tpu.memory_space<vmem>>, vector<1x1x2x128xf32>
    %13 = vector.shape_cast %12 : vector<1x1x2x128xf32> to vector<2x128xf32>
    %c0_24 = arith.constant 0 : index
    %c3_25 = arith.constant 3 : index
    %c0_26 = arith.constant 0 : index
    %c0_27 = arith.constant 0 : index
    %14 = vector.load %arg3[%c0_24, %c3_25, %c0_26, %c0_27] : memref<1x4x2x128xf32, #tpu.memory_space<vmem>>, vector<1x1x2x128xf32>
    %15 = vector.shape_cast %14 : vector<1x1x2x128xf32> to vector<2x128xf32>
    %c0_28 = arith.constant 0 : index
    %c0_29 = arith.constant 0 : index
    %c0_30 = arith.constant 0 : index
    %c0_31 = arith.constant 0 : index
    %16 = vector.load %arg4[%c0_28, %c0_29, %c0_30, %c0_31] : memref<1x4x2x128xf32, #tpu.memory_space<vmem>>, vector<1x1x2x128xf32>
    %17 = vector.shape_cast %16 : vector<1x1x2x128xf32> to vector<2x128xf32>
    %c0_32 = arith.constant 0 : index
    %c1_33 = arith.constant 1 : index
    %c0_34 = arith.constant 0 : index
    %c0_35 = arith.constant 0 : index
    %18 = vector.load %arg4[%c0_32, %c1_33, %c0_34, %c0_35] : memref<1x4x2x128xf32, #tpu.memory_space<vmem>>, vector<1x1x2x128xf32>
    %19 = vector.shape_cast %18 : vector<1x1x2x128xf32> to vector<2x128xf32>
    %c0_36 = arith.constant 0 : index
    %c2_37 = arith.constant 2 : index
    %c0_38 = arith.constant 0 : index
    %c0_39 = arith.constant 0 : index
    %20 = vector.load %arg4[%c0_36, %c2_37, %c0_38, %c0_39] : memref<1x4x2x128xf32, #tpu.memory_space<vmem>>, vector<1x1x2x128xf32>
    %21 = vector.shape_cast %20 : vector<1x1x2x128xf32> to vector<2x128xf32>
    %c0_40 = arith.constant 0 : index
    %c3_41 = arith.constant 3 : index
    %c0_42 = arith.constant 0 : index
    %c0_43 = arith.constant 0 : index
    %22 = vector.load %arg4[%c0_40, %c3_41, %c0_42, %c0_43] : memref<1x4x2x128xf32, #tpu.memory_space<vmem>>, vector<1x1x2x128xf32>
    %23 = vector.shape_cast %22 : vector<1x1x2x128xf32> to vector<2x128xf32>
    %c0_44 = arith.constant 0 : index
    %24 = memref.load %arg5[%c0_44] : memref<48xf32, #tpu.memory_space<smem>>
    %25 = vector.broadcast %24 : f32 to vector<2x128xf32>
    %26 = arith.mulf %25, %1 : vector<2x128xf32>
    %c1_45 = arith.constant 1 : index
    %27 = memref.load %arg5[%c1_45] : memref<48xf32, #tpu.memory_space<smem>>
    %28 = vector.broadcast %27 : f32 to vector<2x128xf32>
    %29 = arith.mulf %28, %3 : vector<2x128xf32>
    %30 = arith.addf %26, %29 : vector<2x128xf32>
    %c2_46 = arith.constant 2 : index
    %31 = memref.load %arg5[%c2_46] : memref<48xf32, #tpu.memory_space<smem>>
    %32 = vector.broadcast %31 : f32 to vector<2x128xf32>
    %33 = arith.mulf %32, %5 : vector<2x128xf32>
    %34 = arith.addf %30, %33 : vector<2x128xf32>
    %c3_47 = arith.constant 3 : index
    %35 = memref.load %arg5[%c3_47] : memref<48xf32, #tpu.memory_space<smem>>
    %36 = vector.broadcast %35 : f32 to vector<2x128xf32>
    %37 = arith.mulf %36, %7 : vector<2x128xf32>
    %38 = arith.addf %34, %37 : vector<2x128xf32>
    %c16 = arith.constant 16 : index
    %39 = memref.load %arg5[%c16] : memref<48xf32, #tpu.memory_space<smem>>
    %40 = vector.broadcast %39 : f32 to vector<2x128xf32>
    %41 = arith.mulf %40, %9 : vector<2x128xf32>
    %42 = arith.addf %38, %41 : vector<2x128xf32>
    %c17 = arith.constant 17 : index
    %43 = memref.load %arg5[%c17] : memref<48xf32, #tpu.memory_space<smem>>
    %44 = vector.broadcast %43 : f32 to vector<2x128xf32>
    %45 = arith.mulf %44, %11 : vector<2x128xf32>
    %46 = arith.addf %42, %45 : vector<2x128xf32>
    %c18 = arith.constant 18 : index
    %47 = memref.load %arg5[%c18] : memref<48xf32, #tpu.memory_space<smem>>
    %48 = vector.broadcast %47 : f32 to vector<2x128xf32>
    %49 = arith.mulf %48, %13 : vector<2x128xf32>
    %50 = arith.addf %46, %49 : vector<2x128xf32>
    %c19 = arith.constant 19 : index
    %51 = memref.load %arg5[%c19] : memref<48xf32, #tpu.memory_space<smem>>
    %52 = vector.broadcast %51 : f32 to vector<2x128xf32>
    %53 = arith.mulf %52, %15 : vector<2x128xf32>
    %54 = arith.addf %50, %53 : vector<2x128xf32>
    %c32 = arith.constant 32 : index
    %55 = memref.load %arg5[%c32] : memref<48xf32, #tpu.memory_space<smem>>
    %56 = vector.broadcast %55 : f32 to vector<2x128xf32>
    %57 = arith.mulf %56, %17 : vector<2x128xf32>
    %58 = arith.addf %54, %57 : vector<2x128xf32>
    %c33 = arith.constant 33 : index
    %59 = memref.load %arg5[%c33] : memref<48xf32, #tpu.memory_space<smem>>
    %60 = vector.broadcast %59 : f32 to vector<2x128xf32>
    %61 = arith.mulf %60, %19 : vector<2x128xf32>
    %62 = arith.addf %58, %61 : vector<2x128xf32>
    %c34 = arith.constant 34 : index
    %63 = memref.load %arg5[%c34] : memref<48xf32, #tpu.memory_space<smem>>
    %64 = vector.broadcast %63 : f32 to vector<2x128xf32>
    %65 = arith.mulf %64, %21 : vector<2x128xf32>
    %66 = arith.addf %62, %65 : vector<2x128xf32>
    %c35 = arith.constant 35 : index
    %67 = memref.load %arg5[%c35] : memref<48xf32, #tpu.memory_space<smem>>
    %68 = vector.broadcast %67 : f32 to vector<2x128xf32>
    %69 = arith.mulf %68, %23 : vector<2x128xf32>
    %70 = arith.addf %66, %69 : vector<2x128xf32>
    %c0_48 = arith.constant 0 : index
    %71 = memref.load %arg6[%c0_48] : memref<4xf32, #tpu.memory_space<smem>>
    %72 = vector.broadcast %71 : f32 to vector<2x128xf32>
    %73 = arith.addf %70, %72 : vector<2x128xf32>
    %cst = arith.constant 0.000000e+00 : f32
    %74 = vector.broadcast %cst : f32 to vector<2x128xf32>
    %75 = arith.maximumf %73, %74 : vector<2x128xf32>
    %c4 = arith.constant 4 : index
    %76 = memref.load %arg5[%c4] : memref<48xf32, #tpu.memory_space<smem>>
    %77 = vector.broadcast %76 : f32 to vector<2x128xf32>
    %78 = arith.mulf %77, %1 : vector<2x128xf32>
    %c5 = arith.constant 5 : index
    %79 = memref.load %arg5[%c5] : memref<48xf32, #tpu.memory_space<smem>>
    %80 = vector.broadcast %79 : f32 to vector<2x128xf32>
    %81 = arith.mulf %80, %3 : vector<2x128xf32>
    %82 = arith.addf %78, %81 : vector<2x128xf32>
    %c6 = arith.constant 6 : index
    %83 = memref.load %arg5[%c6] : memref<48xf32, #tpu.memory_space<smem>>
    %84 = vector.broadcast %83 : f32 to vector<2x128xf32>
    %85 = arith.mulf %84, %5 : vector<2x128xf32>
    %86 = arith.addf %82, %85 : vector<2x128xf32>
    %c7 = arith.constant 7 : index
    %87 = memref.load %arg5[%c7] : memref<48xf32, #tpu.memory_space<smem>>
    %88 = vector.broadcast %87 : f32 to vector<2x128xf32>
    %89 = arith.mulf %88, %7 : vector<2x128xf32>
    %90 = arith.addf %86, %89 : vector<2x128xf32>
    %c20 = arith.constant 20 : index
    %91 = memref.load %arg5[%c20] : memref<48xf32, #tpu.memory_space<smem>>
    %92 = vector.broadcast %91 : f32 to vector<2x128xf32>
    %93 = arith.mulf %92, %9 : vector<2x128xf32>
    %94 = arith.addf %90, %93 : vector<2x128xf32>
    %c21 = arith.constant 21 : index
    %95 = memref.load %arg5[%c21] : memref<48xf32, #tpu.memory_space<smem>>
    %96 = vector.broadcast %95 : f32 to vector<2x128xf32>
    %97 = arith.mulf %96, %11 : vector<2x128xf32>
    %98 = arith.addf %94, %97 : vector<2x128xf32>
    %c22 = arith.constant 22 : index
    %99 = memref.load %arg5[%c22] : memref<48xf32, #tpu.memory_space<smem>>
    %100 = vector.broadcast %99 : f32 to vector<2x128xf32>
    %101 = arith.mulf %100, %13 : vector<2x128xf32>
    %102 = arith.addf %98, %101 : vector<2x128xf32>
    %c23 = arith.constant 23 : index
    %103 = memref.load %arg5[%c23] : memref<48xf32, #tpu.memory_space<smem>>
    %104 = vector.broadcast %103 : f32 to vector<2x128xf32>
    %105 = arith.mulf %104, %15 : vector<2x128xf32>
    %106 = arith.addf %102, %105 : vector<2x128xf32>
    %c36 = arith.constant 36 : index
    %107 = memref.load %arg5[%c36] : memref<48xf32, #tpu.memory_space<smem>>
    %108 = vector.broadcast %107 : f32 to vector<2x128xf32>
    %109 = arith.mulf %108, %17 : vector<2x128xf32>
    %110 = arith.addf %106, %109 : vector<2x128xf32>
    %c37 = arith.constant 37 : index
    %111 = memref.load %arg5[%c37] : memref<48xf32, #tpu.memory_space<smem>>
    %112 = vector.broadcast %111 : f32 to vector<2x128xf32>
    %113 = arith.mulf %112, %19 : vector<2x128xf32>
    %114 = arith.addf %110, %113 : vector<2x128xf32>
    %c38 = arith.constant 38 : index
    %115 = memref.load %arg5[%c38] : memref<48xf32, #tpu.memory_space<smem>>
    %116 = vector.broadcast %115 : f32 to vector<2x128xf32>
    %117 = arith.mulf %116, %21 : vector<2x128xf32>
    %118 = arith.addf %114, %117 : vector<2x128xf32>
    %c39 = arith.constant 39 : index
    %119 = memref.load %arg5[%c39] : memref<48xf32, #tpu.memory_space<smem>>
    %120 = vector.broadcast %119 : f32 to vector<2x128xf32>
    %121 = arith.mulf %120, %23 : vector<2x128xf32>
    %122 = arith.addf %118, %121 : vector<2x128xf32>
    %c1_49 = arith.constant 1 : index
    %123 = memref.load %arg6[%c1_49] : memref<4xf32, #tpu.memory_space<smem>>
    %124 = vector.broadcast %123 : f32 to vector<2x128xf32>
    %125 = arith.addf %122, %124 : vector<2x128xf32>
    %cst_50 = arith.constant 0.000000e+00 : f32
    %126 = vector.broadcast %cst_50 : f32 to vector<2x128xf32>
    %127 = arith.maximumf %125, %126 : vector<2x128xf32>
    %c8 = arith.constant 8 : index
    %128 = memref.load %arg5[%c8] : memref<48xf32, #tpu.memory_space<smem>>
    %129 = vector.broadcast %128 : f32 to vector<2x128xf32>
    %130 = arith.mulf %129, %1 : vector<2x128xf32>
    %c9 = arith.constant 9 : index
    %131 = memref.load %arg5[%c9] : memref<48xf32, #tpu.memory_space<smem>>
    %132 = vector.broadcast %131 : f32 to vector<2x128xf32>
    %133 = arith.mulf %132, %3 : vector<2x128xf32>
    %134 = arith.addf %130, %133 : vector<2x128xf32>
    %c10 = arith.constant 10 : index
    %135 = memref.load %arg5[%c10] : memref<48xf32, #tpu.memory_space<smem>>
    %136 = vector.broadcast %135 : f32 to vector<2x128xf32>
    %137 = arith.mulf %136, %5 : vector<2x128xf32>
    %138 = arith.addf %134, %137 : vector<2x128xf32>
    %c11 = arith.constant 11 : index
    %139 = memref.load %arg5[%c11] : memref<48xf32, #tpu.memory_space<smem>>
    %140 = vector.broadcast %139 : f32 to vector<2x128xf32>
    %141 = arith.mulf %140, %7 : vector<2x128xf32>
    %142 = arith.addf %138, %141 : vector<2x128xf32>
    %c24 = arith.constant 24 : index
    %143 = memref.load %arg5[%c24] : memref<48xf32, #tpu.memory_space<smem>>
    %144 = vector.broadcast %143 : f32 to vector<2x128xf32>
    %145 = arith.mulf %144, %9 : vector<2x128xf32>
    %146 = arith.addf %142, %145 : vector<2x128xf32>
    %c25 = arith.constant 25 : index
    %147 = memref.load %arg5[%c25] : memref<48xf32, #tpu.memory_space<smem>>
    %148 = vector.broadcast %147 : f32 to vector<2x128xf32>
    %149 = arith.mulf %148, %11 : vector<2x128xf32>
    %150 = arith.addf %146, %149 : vector<2x128xf32>
    %c26 = arith.constant 26 : index
    %151 = memref.load %arg5[%c26] : memref<48xf32, #tpu.memory_space<smem>>
    %152 = vector.broadcast %151 : f32 to vector<2x128xf32>
    %153 = arith.mulf %152, %13 : vector<2x128xf32>
    %154 = arith.addf %150, %153 : vector<2x128xf32>
    %c27 = arith.constant 27 : index
    %155 = memref.load %arg5[%c27] : memref<48xf32, #tpu.memory_space<smem>>
    %156 = vector.broadcast %155 : f32 to vector<2x128xf32>
    %157 = arith.mulf %156, %15 : vector<2x128xf32>
    %158 = arith.addf %154, %157 : vector<2x128xf32>
    %c40 = arith.constant 40 : index
    %159 = memref.load %arg5[%c40] : memref<48xf32, #tpu.memory_space<smem>>
    %160 = vector.broadcast %159 : f32 to vector<2x128xf32>
    %161 = arith.mulf %160, %17 : vector<2x128xf32>
    %162 = arith.addf %158, %161 : vector<2x128xf32>
    %c41 = arith.constant 41 : index
    %163 = memref.load %arg5[%c41] : memref<48xf32, #tpu.memory_space<smem>>
    %164 = vector.broadcast %163 : f32 to vector<2x128xf32>
    %165 = arith.mulf %164, %19 : vector<2x128xf32>
    %166 = arith.addf %162, %165 : vector<2x128xf32>
    %c42 = arith.constant 42 : index
    %167 = memref.load %arg5[%c42] : memref<48xf32, #tpu.memory_space<smem>>
    %168 = vector.broadcast %167 : f32 to vector<2x128xf32>
    %169 = arith.mulf %168, %21 : vector<2x128xf32>
    %170 = arith.addf %166, %169 : vector<2x128xf32>
    %c43 = arith.constant 43 : index
    %171 = memref.load %arg5[%c43] : memref<48xf32, #tpu.memory_space<smem>>
    %172 = vector.broadcast %171 : f32 to vector<2x128xf32>
    %173 = arith.mulf %172, %23 : vector<2x128xf32>
    %174 = arith.addf %170, %173 : vector<2x128xf32>
    %c2_51 = arith.constant 2 : index
    %175 = memref.load %arg6[%c2_51] : memref<4xf32, #tpu.memory_space<smem>>
    %176 = vector.broadcast %175 : f32 to vector<2x128xf32>
    %177 = arith.addf %174, %176 : vector<2x128xf32>
    %cst_52 = arith.constant 0.000000e+00 : f32
    %178 = vector.broadcast %cst_52 : f32 to vector<2x128xf32>
    %179 = arith.maximumf %177, %178 : vector<2x128xf32>
    %c12 = arith.constant 12 : index
    %180 = memref.load %arg5[%c12] : memref<48xf32, #tpu.memory_space<smem>>
    %181 = vector.broadcast %180 : f32 to vector<2x128xf32>
    %182 = arith.mulf %181, %1 : vector<2x128xf32>
    %c13 = arith.constant 13 : index
    %183 = memref.load %arg5[%c13] : memref<48xf32, #tpu.memory_space<smem>>
    %184 = vector.broadcast %183 : f32 to vector<2x128xf32>
    %185 = arith.mulf %184, %3 : vector<2x128xf32>
    %186 = arith.addf %182, %185 : vector<2x128xf32>
    %c14 = arith.constant 14 : index
    %187 = memref.load %arg5[%c14] : memref<48xf32, #tpu.memory_space<smem>>
    %188 = vector.broadcast %187 : f32 to vector<2x128xf32>
    %189 = arith.mulf %188, %5 : vector<2x128xf32>
    %190 = arith.addf %186, %189 : vector<2x128xf32>
    %c15 = arith.constant 15 : index
    %191 = memref.load %arg5[%c15] : memref<48xf32, #tpu.memory_space<smem>>
    %192 = vector.broadcast %191 : f32 to vector<2x128xf32>
    %193 = arith.mulf %192, %7 : vector<2x128xf32>
    %194 = arith.addf %190, %193 : vector<2x128xf32>
    %c28 = arith.constant 28 : index
    %195 = memref.load %arg5[%c28] : memref<48xf32, #tpu.memory_space<smem>>
    %196 = vector.broadcast %195 : f32 to vector<2x128xf32>
    %197 = arith.mulf %196, %9 : vector<2x128xf32>
    %198 = arith.addf %194, %197 : vector<2x128xf32>
    %c29 = arith.constant 29 : index
    %199 = memref.load %arg5[%c29] : memref<48xf32, #tpu.memory_space<smem>>
    %200 = vector.broadcast %199 : f32 to vector<2x128xf32>
    %201 = arith.mulf %200, %11 : vector<2x128xf32>
    %202 = arith.addf %198, %201 : vector<2x128xf32>
    %c30 = arith.constant 30 : index
    %203 = memref.load %arg5[%c30] : memref<48xf32, #tpu.memory_space<smem>>
    %204 = vector.broadcast %203 : f32 to vector<2x128xf32>
    %205 = arith.mulf %204, %13 : vector<2x128xf32>
    %206 = arith.addf %202, %205 : vector<2x128xf32>
    %c31 = arith.constant 31 : index
    %207 = memref.load %arg5[%c31] : memref<48xf32, #tpu.memory_space<smem>>
    %208 = vector.broadcast %207 : f32 to vector<2x128xf32>
    %209 = arith.mulf %208, %15 : vector<2x128xf32>
    %210 = arith.addf %206, %209 : vector<2x128xf32>
    %c44 = arith.constant 44 : index
    %211 = memref.load %arg5[%c44] : memref<48xf32, #tpu.memory_space<smem>>
    %212 = vector.broadcast %211 : f32 to vector<2x128xf32>
    %213 = arith.mulf %212, %17 : vector<2x128xf32>
    %214 = arith.addf %210, %213 : vector<2x128xf32>
    %c45 = arith.constant 45 : index
    %215 = memref.load %arg5[%c45] : memref<48xf32, #tpu.memory_space<smem>>
    %216 = vector.broadcast %215 : f32 to vector<2x128xf32>
    %217 = arith.mulf %216, %19 : vector<2x128xf32>
    %218 = arith.addf %214, %217 : vector<2x128xf32>
    %c46 = arith.constant 46 : index
    %219 = memref.load %arg5[%c46] : memref<48xf32, #tpu.memory_space<smem>>
    %220 = vector.broadcast %219 : f32 to vector<2x128xf32>
    %221 = arith.mulf %220, %21 : vector<2x128xf32>
    %222 = arith.addf %218, %221 : vector<2x128xf32>
    %c47 = arith.constant 47 : index
    %223 = memref.load %arg5[%c47] : memref<48xf32, #tpu.memory_space<smem>>
    %224 = vector.broadcast %223 : f32 to vector<2x128xf32>
    %225 = arith.mulf %224, %23 : vector<2x128xf32>
    %226 = arith.addf %222, %225 : vector<2x128xf32>
    %c3_53 = arith.constant 3 : index
    %227 = memref.load %arg6[%c3_53] : memref<4xf32, #tpu.memory_space<smem>>
    %228 = vector.broadcast %227 : f32 to vector<2x128xf32>
    %229 = arith.addf %226, %228 : vector<2x128xf32>
    %cst_54 = arith.constant 0.000000e+00 : f32
    %230 = vector.broadcast %cst_54 : f32 to vector<2x128xf32>
    %231 = arith.maximumf %229, %230 : vector<2x128xf32>
    %c0_55 = arith.constant 0 : index
    %232 = memref.load %arg7[%c0_55] : memref<4xf32, #tpu.memory_space<smem>>
    %233 = vector.broadcast %232 : f32 to vector<2x128xf32>
    %234 = arith.mulf %233, %75 : vector<2x128xf32>
    %c1_56 = arith.constant 1 : index
    %235 = memref.load %arg7[%c1_56] : memref<4xf32, #tpu.memory_space<smem>>
    %236 = vector.broadcast %235 : f32 to vector<2x128xf32>
    %237 = arith.mulf %236, %127 : vector<2x128xf32>
    %238 = arith.addf %234, %237 : vector<2x128xf32>
    %c2_57 = arith.constant 2 : index
    %239 = memref.load %arg7[%c2_57] : memref<4xf32, #tpu.memory_space<smem>>
    %240 = vector.broadcast %239 : f32 to vector<2x128xf32>
    %241 = arith.mulf %240, %179 : vector<2x128xf32>
    %242 = arith.addf %238, %241 : vector<2x128xf32>
    %c3_58 = arith.constant 3 : index
    %243 = memref.load %arg7[%c3_58] : memref<4xf32, #tpu.memory_space<smem>>
    %244 = vector.broadcast %243 : f32 to vector<2x128xf32>
    %245 = arith.mulf %244, %231 : vector<2x128xf32>
    %246 = arith.addf %242, %245 : vector<2x128xf32>
    %c0_59 = arith.constant 0 : index
    %247 = memref.load %arg8[%c0_59] : memref<1xf32, #tpu.memory_space<smem>>
    %248 = vector.broadcast %247 : f32 to vector<2x128xf32>
    %249 = arith.addf %246, %248 : vector<2x128xf32>
    %250 = arith.negf %249 : vector<2x128xf32>
    %251 = math.exp %250 : vector<2x128xf32>
    %cst_60 = arith.constant 1.000000e+00 : f32
    %252 = vector.broadcast %cst_60 : f32 to vector<2x128xf32>
    %253 = arith.addf %252, %251 : vector<2x128xf32>
    %254 = arith.divf %252, %253 : vector<2x128xf32>
    %c0_61 = arith.constant 0 : index
    %255 = memref.load %arg9[%c0_61] : memref<36xf32, #tpu.memory_space<smem>>
    %256 = vector.broadcast %255 : f32 to vector<2x128xf32>
    %257 = arith.mulf %256, %1 : vector<2x128xf32>
    %c1_62 = arith.constant 1 : index
    %258 = memref.load %arg9[%c1_62] : memref<36xf32, #tpu.memory_space<smem>>
    %259 = vector.broadcast %258 : f32 to vector<2x128xf32>
    %260 = arith.mulf %259, %3 : vector<2x128xf32>
    %261 = arith.addf %257, %260 : vector<2x128xf32>
    %c2_63 = arith.constant 2 : index
    %262 = memref.load %arg9[%c2_63] : memref<36xf32, #tpu.memory_space<smem>>
    %263 = vector.broadcast %262 : f32 to vector<2x128xf32>
    %264 = arith.mulf %263, %5 : vector<2x128xf32>
    %265 = arith.addf %261, %264 : vector<2x128xf32>
    %c3_64 = arith.constant 3 : index
    %266 = memref.load %arg9[%c3_64] : memref<36xf32, #tpu.memory_space<smem>>
    %267 = vector.broadcast %266 : f32 to vector<2x128xf32>
    %268 = arith.mulf %267, %7 : vector<2x128xf32>
    %269 = arith.addf %265, %268 : vector<2x128xf32>
    %c12_65 = arith.constant 12 : index
    %270 = memref.load %arg9[%c12_65] : memref<36xf32, #tpu.memory_space<smem>>
    %271 = vector.broadcast %270 : f32 to vector<2x128xf32>
    %272 = arith.mulf %271, %9 : vector<2x128xf32>
    %273 = arith.addf %269, %272 : vector<2x128xf32>
    %c13_66 = arith.constant 13 : index
    %274 = memref.load %arg9[%c13_66] : memref<36xf32, #tpu.memory_space<smem>>
    %275 = vector.broadcast %274 : f32 to vector<2x128xf32>
    %276 = arith.mulf %275, %11 : vector<2x128xf32>
    %277 = arith.addf %273, %276 : vector<2x128xf32>
    %c14_67 = arith.constant 14 : index
    %278 = memref.load %arg9[%c14_67] : memref<36xf32, #tpu.memory_space<smem>>
    %279 = vector.broadcast %278 : f32 to vector<2x128xf32>
    %280 = arith.mulf %279, %13 : vector<2x128xf32>
    %281 = arith.addf %277, %280 : vector<2x128xf32>
    %c15_68 = arith.constant 15 : index
    %282 = memref.load %arg9[%c15_68] : memref<36xf32, #tpu.memory_space<smem>>
    %283 = vector.broadcast %282 : f32 to vector<2x128xf32>
    %284 = arith.mulf %283, %15 : vector<2x128xf32>
    %285 = arith.addf %281, %284 : vector<2x128xf32>
    %c24_69 = arith.constant 24 : index
    %286 = memref.load %arg9[%c24_69] : memref<36xf32, #tpu.memory_space<smem>>
    %287 = vector.broadcast %286 : f32 to vector<2x128xf32>
    %288 = arith.mulf %287, %17 : vector<2x128xf32>
    %289 = arith.addf %285, %288 : vector<2x128xf32>
    %c25_70 = arith.constant 25 : index
    %290 = memref.load %arg9[%c25_70] : memref<36xf32, #tpu.memory_space<smem>>
    %291 = vector.broadcast %290 : f32 to vector<2x128xf32>
    %292 = arith.mulf %291, %19 : vector<2x128xf32>
    %293 = arith.addf %289, %292 : vector<2x128xf32>
    %c26_71 = arith.constant 26 : index
    %294 = memref.load %arg9[%c26_71] : memref<36xf32, #tpu.memory_space<smem>>
    %295 = vector.broadcast %294 : f32 to vector<2x128xf32>
    %296 = arith.mulf %295, %21 : vector<2x128xf32>
    %297 = arith.addf %293, %296 : vector<2x128xf32>
    %c27_72 = arith.constant 27 : index
    %298 = memref.load %arg9[%c27_72] : memref<36xf32, #tpu.memory_space<smem>>
    %299 = vector.broadcast %298 : f32 to vector<2x128xf32>
    %300 = arith.mulf %299, %23 : vector<2x128xf32>
    %301 = arith.addf %297, %300 : vector<2x128xf32>
    %302 = arith.mulf %254, %301 : vector<2x128xf32>
    %c0_73 = arith.constant 0 : index
    %303 = memref.load %arg10[%c0_73] : memref<3xf32, #tpu.memory_space<smem>>
    %304 = vector.broadcast %303 : f32 to vector<2x128xf32>
    %305 = arith.addf %302, %304 : vector<2x128xf32>
    %c4_74 = arith.constant 4 : index
    %306 = memref.load %arg9[%c4_74] : memref<36xf32, #tpu.memory_space<smem>>
    %307 = vector.broadcast %306 : f32 to vector<2x128xf32>
    %308 = arith.mulf %307, %1 : vector<2x128xf32>
    %c5_75 = arith.constant 5 : index
    %309 = memref.load %arg9[%c5_75] : memref<36xf32, #tpu.memory_space<smem>>
    %310 = vector.broadcast %309 : f32 to vector<2x128xf32>
    %311 = arith.mulf %310, %3 : vector<2x128xf32>
    %312 = arith.addf %308, %311 : vector<2x128xf32>
    %c6_76 = arith.constant 6 : index
    %313 = memref.load %arg9[%c6_76] : memref<36xf32, #tpu.memory_space<smem>>
    %314 = vector.broadcast %313 : f32 to vector<2x128xf32>
    %315 = arith.mulf %314, %5 : vector<2x128xf32>
    %316 = arith.addf %312, %315 : vector<2x128xf32>
    %c7_77 = arith.constant 7 : index
    %317 = memref.load %arg9[%c7_77] : memref<36xf32, #tpu.memory_space<smem>>
    %318 = vector.broadcast %317 : f32 to vector<2x128xf32>
    %319 = arith.mulf %318, %7 : vector<2x128xf32>
    %320 = arith.addf %316, %319 : vector<2x128xf32>
    %c16_78 = arith.constant 16 : index
    %321 = memref.load %arg9[%c16_78] : memref<36xf32, #tpu.memory_space<smem>>
    %322 = vector.broadcast %321 : f32 to vector<2x128xf32>
    %323 = arith.mulf %322, %9 : vector<2x128xf32>
    %324 = arith.addf %320, %323 : vector<2x128xf32>
    %c17_79 = arith.constant 17 : index
    %325 = memref.load %arg9[%c17_79] : memref<36xf32, #tpu.memory_space<smem>>
    %326 = vector.broadcast %325 : f32 to vector<2x128xf32>
    %327 = arith.mulf %326, %11 : vector<2x128xf32>
    %328 = arith.addf %324, %327 : vector<2x128xf32>
    %c18_80 = arith.constant 18 : index
    %329 = memref.load %arg9[%c18_80] : memref<36xf32, #tpu.memory_space<smem>>
    %330 = vector.broadcast %329 : f32 to vector<2x128xf32>
    %331 = arith.mulf %330, %13 : vector<2x128xf32>
    %332 = arith.addf %328, %331 : vector<2x128xf32>
    %c19_81 = arith.constant 19 : index
    %333 = memref.load %arg9[%c19_81] : memref<36xf32, #tpu.memory_space<smem>>
    %334 = vector.broadcast %333 : f32 to vector<2x128xf32>
    %335 = arith.mulf %334, %15 : vector<2x128xf32>
    %336 = arith.addf %332, %335 : vector<2x128xf32>
    %c28_82 = arith.constant 28 : index
    %337 = memref.load %arg9[%c28_82] : memref<36xf32, #tpu.memory_space<smem>>
    %338 = vector.broadcast %337 : f32 to vector<2x128xf32>
    %339 = arith.mulf %338, %17 : vector<2x128xf32>
    %340 = arith.addf %336, %339 : vector<2x128xf32>
    %c29_83 = arith.constant 29 : index
    %341 = memref.load %arg9[%c29_83] : memref<36xf32, #tpu.memory_space<smem>>
    %342 = vector.broadcast %341 : f32 to vector<2x128xf32>
    %343 = arith.mulf %342, %19 : vector<2x128xf32>
    %344 = arith.addf %340, %343 : vector<2x128xf32>
    %c30_84 = arith.constant 30 : index
    %345 = memref.load %arg9[%c30_84] : memref<36xf32, #tpu.memory_space<smem>>
    %346 = vector.broadcast %345 : f32 to vector<2x128xf32>
    %347 = arith.mulf %346, %21 : vector<2x128xf32>
    %348 = arith.addf %344, %347 : vector<2x128xf32>
    %c31_85 = arith.constant 31 : index
    %349 = memref.load %arg9[%c31_85] : memref<36xf32, #tpu.memory_space<smem>>
    %350 = vector.broadcast %349 : f32 to vector<2x128xf32>
    %351 = arith.mulf %350, %23 : vector<2x128xf32>
    %352 = arith.addf %348, %351 : vector<2x128xf32>
    %353 = arith.mulf %254, %352 : vector<2x128xf32>
    %c1_86 = arith.constant 1 : index
    %354 = memref.load %arg10[%c1_86] : memref<3xf32, #tpu.memory_space<smem>>
    %355 = vector.broadcast %354 : f32 to vector<2x128xf32>
    %356 = arith.addf %353, %355 : vector<2x128xf32>
    %c8_87 = arith.constant 8 : index
    %357 = memref.load %arg9[%c8_87] : memref<36xf32, #tpu.memory_space<smem>>
    %358 = vector.broadcast %357 : f32 to vector<2x128xf32>
    %359 = arith.mulf %358, %1 : vector<2x128xf32>
    %c9_88 = arith.constant 9 : index
    %360 = memref.load %arg9[%c9_88] : memref<36xf32, #tpu.memory_space<smem>>
    %361 = vector.broadcast %360 : f32 to vector<2x128xf32>
    %362 = arith.mulf %361, %3 : vector<2x128xf32>
    %363 = arith.addf %359, %362 : vector<2x128xf32>
    %c10_89 = arith.constant 10 : index
    %364 = memref.load %arg9[%c10_89] : memref<36xf32, #tpu.memory_space<smem>>
    %365 = vector.broadcast %364 : f32 to vector<2x128xf32>
    %366 = arith.mulf %365, %5 : vector<2x128xf32>
    %367 = arith.addf %363, %366 : vector<2x128xf32>
    %c11_90 = arith.constant 11 : index
    %368 = memref.load %arg9[%c11_90] : memref<36xf32, #tpu.memory_space<smem>>
    %369 = vector.broadcast %368 : f32 to vector<2x128xf32>
    %370 = arith.mulf %369, %7 : vector<2x128xf32>
    %371 = arith.addf %367, %370 : vector<2x128xf32>
    %c20_91 = arith.constant 20 : index
    %372 = memref.load %arg9[%c20_91] : memref<36xf32, #tpu.memory_space<smem>>
    %373 = vector.broadcast %372 : f32 to vector<2x128xf32>
    %374 = arith.mulf %373, %9 : vector<2x128xf32>
    %375 = arith.addf %371, %374 : vector<2x128xf32>
    %c21_92 = arith.constant 21 : index
    %376 = memref.load %arg9[%c21_92] : memref<36xf32, #tpu.memory_space<smem>>
    %377 = vector.broadcast %376 : f32 to vector<2x128xf32>
    %378 = arith.mulf %377, %11 : vector<2x128xf32>
    %379 = arith.addf %375, %378 : vector<2x128xf32>
    %c22_93 = arith.constant 22 : index
    %380 = memref.load %arg9[%c22_93] : memref<36xf32, #tpu.memory_space<smem>>
    %381 = vector.broadcast %380 : f32 to vector<2x128xf32>
    %382 = arith.mulf %381, %13 : vector<2x128xf32>
    %383 = arith.addf %379, %382 : vector<2x128xf32>
    %c23_94 = arith.constant 23 : index
    %384 = memref.load %arg9[%c23_94] : memref<36xf32, #tpu.memory_space<smem>>
    %385 = vector.broadcast %384 : f32 to vector<2x128xf32>
    %386 = arith.mulf %385, %15 : vector<2x128xf32>
    %387 = arith.addf %383, %386 : vector<2x128xf32>
    %c32_95 = arith.constant 32 : index
    %388 = memref.load %arg9[%c32_95] : memref<36xf32, #tpu.memory_space<smem>>
    %389 = vector.broadcast %388 : f32 to vector<2x128xf32>
    %390 = arith.mulf %389, %17 : vector<2x128xf32>
    %391 = arith.addf %387, %390 : vector<2x128xf32>
    %c33_96 = arith.constant 33 : index
    %392 = memref.load %arg9[%c33_96] : memref<36xf32, #tpu.memory_space<smem>>
    %393 = vector.broadcast %392 : f32 to vector<2x128xf32>
    %394 = arith.mulf %393, %19 : vector<2x128xf32>
    %395 = arith.addf %391, %394 : vector<2x128xf32>
    %c34_97 = arith.constant 34 : index
    %396 = memref.load %arg9[%c34_97] : memref<36xf32, #tpu.memory_space<smem>>
    %397 = vector.broadcast %396 : f32 to vector<2x128xf32>
    %398 = arith.mulf %397, %21 : vector<2x128xf32>
    %399 = arith.addf %395, %398 : vector<2x128xf32>
    %c35_98 = arith.constant 35 : index
    %400 = memref.load %arg9[%c35_98] : memref<36xf32, #tpu.memory_space<smem>>
    %401 = vector.broadcast %400 : f32 to vector<2x128xf32>
    %402 = arith.mulf %401, %23 : vector<2x128xf32>
    %403 = arith.addf %399, %402 : vector<2x128xf32>
    %404 = arith.mulf %254, %403 : vector<2x128xf32>
    %c2_99 = arith.constant 2 : index
    %405 = memref.load %arg10[%c2_99] : memref<3xf32, #tpu.memory_space<smem>>
    %406 = vector.broadcast %405 : f32 to vector<2x128xf32>
    %407 = arith.addf %404, %406 : vector<2x128xf32>
    %408 = arith.maximumf %305, %356 : vector<2x128xf32>
    %409 = arith.maximumf %408, %407 : vector<2x128xf32>
    %410 = arith.subf %305, %409 : vector<2x128xf32>
    %411 = math.exp %410 : vector<2x128xf32>
    %412 = arith.subf %356, %409 : vector<2x128xf32>
    %413 = math.exp %412 : vector<2x128xf32>
    %414 = arith.subf %407, %409 : vector<2x128xf32>
    %415 = math.exp %414 : vector<2x128xf32>
    %416 = arith.addf %411, %413 : vector<2x128xf32>
    %417 = arith.addf %416, %415 : vector<2x128xf32>
    %418 = tpu.reciprocal %417 : vector<2x128xf32> -> vector<2x128xf32>
    %419 = arith.mulf %254, %418 : vector<2x128xf32>
    %420 = arith.mulf %411, %419 : vector<2x128xf32>
    %421 = arith.mulf %413, %419 : vector<2x128xf32>
    %422 = arith.mulf %415, %419 : vector<2x128xf32>
    %423 = arith.mulf %420, %1 : vector<2x128xf32>
    %424 = arith.mulf %421, %9 : vector<2x128xf32>
    %425 = arith.addf %423, %424 : vector<2x128xf32>
    %426 = arith.mulf %422, %17 : vector<2x128xf32>
    %427 = arith.addf %425, %426 : vector<2x128xf32>
    %c0_100 = arith.constant 0 : index
    %c0_101 = arith.constant 0 : index
    %c0_102 = arith.constant 0 : index
    %c0_103 = arith.constant 0 : index
    %428 = vector.load %arg11[%c0_100, %c0_101, %c0_102, %c0_103] : memref<1x4x2x128xf32, #tpu.memory_space<vmem>>, vector<1x1x2x128xf32>
    %429 = vector.shape_cast %428 : vector<1x1x2x128xf32> to vector<2x128xf32>
    %430 = vector.shape_cast %427 : vector<2x128xf32> to vector<1x1x2x128xf32>
    tpu.vector_store %arg11[%c0_100, %c0_101, %c0_102, %c0_103], %430 {strides = array<i32>} : memref<1x4x2x128xf32, #tpu.memory_space<vmem>>, vector<1x1x2x128xf32>,
    %431 = arith.mulf %420, %3 : vector<2x128xf32>
    %432 = arith.mulf %421, %11 : vector<2x128xf32>
    %433 = arith.addf %431, %432 : vector<2x128xf32>
    %434 = arith.mulf %422, %19 : vector<2x128xf32>
    %435 = arith.addf %433, %434 : vector<2x128xf32>
    %c0_104 = arith.constant 0 : index
    %c1_105 = arith.constant 1 : index
    %c0_106 = arith.constant 0 : index
    %c0_107 = arith.constant 0 : index
    %436 = vector.load %arg11[%c0_104, %c1_105, %c0_106, %c0_107] : memref<1x4x2x128xf32, #tpu.memory_space<vmem>>, vector<1x1x2x128xf32>
    %437 = vector.shape_cast %436 : vector<1x1x2x128xf32> to vector<2x128xf32>
    %438 = vector.shape_cast %435 : vector<2x128xf32> to vector<1x1x2x128xf32>
    tpu.vector_store %arg11[%c0_104, %c1_105, %c0_106, %c0_107], %438 {strides = array<i32>} : memref<1x4x2x128xf32, #tpu.memory_space<vmem>>, vector<1x1x2x128xf32>,
    %439 = arith.mulf %420, %5 : vector<2x128xf32>
    %440 = arith.mulf %421, %13 : vector<2x128xf32>
    %441 = arith.addf %439, %440 : vector<2x128xf32>
    %442 = arith.mulf %422, %21 : vector<2x128xf32>
    %443 = arith.addf %441, %442 : vector<2x128xf32>
    %c0_108 = arith.constant 0 : index
    %c2_109 = arith.constant 2 : index
    %c0_110 = arith.constant 0 : index
    %c0_111 = arith.constant 0 : index
    %444 = vector.load %arg11[%c0_108, %c2_109, %c0_110, %c0_111] : memref<1x4x2x128xf32, #tpu.memory_space<vmem>>, vector<1x1x2x128xf32>
    %445 = vector.shape_cast %444 : vector<1x1x2x128xf32> to vector<2x128xf32>
    %446 = vector.shape_cast %443 : vector<2x128xf32> to vector<1x1x2x128xf32>
    tpu.vector_store %arg11[%c0_108, %c2_109, %c0_110, %c0_111], %446 {strides = array<i32>} : memref<1x4x2x128xf32, #tpu.memory_space<vmem>>, vector<1x1x2x128xf32>,
    %447 = arith.mulf %420, %7 : vector<2x128xf32>
    %448 = arith.mulf %421, %15 : vector<2x128xf32>
    %449 = arith.addf %447, %448 : vector<2x128xf32>
    %450 = arith.mulf %422, %23 : vector<2x128xf32>
    %451 = arith.addf %449, %450 : vector<2x128xf32>
    %c0_112 = arith.constant 0 : index
    %c3_113 = arith.constant 3 : index
    %c0_114 = arith.constant 0 : index
    %c0_115 = arith.constant 0 : index
    %452 = vector.load %arg11[%c0_112, %c3_113, %c0_114, %c0_115] : memref<1x4x2x128xf32, #tpu.memory_space<vmem>>, vector<1x1x2x128xf32>
    %453 = vector.shape_cast %452 : vector<1x1x2x128xf32> to vector<2x128xf32>
    %454 = vector.shape_cast %451 : vector<2x128xf32> to vector<1x1x2x128xf32>
    tpu.vector_store %arg11[%c0_112, %c3_113, %c0_114, %c0_115], %454 {strides = array<i32>} : memref<1x4x2x128xf32, #tpu.memory_space<vmem>>, vector<1x1x2x128xf32>,
    return
  }
  func.func @transform_0(%arg0: i32, %arg1: i32) -> (i32, i32, i32, i32) {
    %c0_i32 = arith.constant 0 : i32
    %c0_i32_0 = arith.constant 0 : i32
    %c0_i32_1 = arith.constant 0 : i32
    return %arg0, %c0_i32, %arg1, %c0_i32_0 : i32, i32, i32, i32
  }
  func.func @transform_1(%arg0: i32, %arg1: i32) -> (i32, i32, i32, i32) {
    %c0_i32 = arith.constant 0 : i32
    %c0_i32_0 = arith.constant 0 : i32
    %c0_i32_1 = arith.constant 0 : i32
    return %arg0, %c0_i32, %arg1, %c0_i32_0 : i32, i32, i32, i32
  }
  func.func @transform_2(%arg0: i32, %arg1: i32) -> (i32, i32, i32, i32) {
    %c0_i32 = arith.constant 0 : i32
    %c0_i32_0 = arith.constant 0 : i32
    %c0_i32_1 = arith.constant 0 : i32
    return %arg0, %c0_i32, %arg1, %c0_i32_0 : i32, i32, i32, i32
  }
  func.func @transform_3(%arg0: i32, %arg1: i32) -> i32 {
    %c0_i32 = arith.constant 0 : i32
    %c0_i32_0 = arith.constant 0 : i32
    return %c0_i32 : i32
  }
  func.func @transform_4(%arg0: i32, %arg1: i32) -> i32 {
    %c0_i32 = arith.constant 0 : i32
    %c0_i32_0 = arith.constant 0 : i32
    return %c0_i32 : i32
  }
  func.func @transform_5(%arg0: i32, %arg1: i32) -> i32 {
    %c0_i32 = arith.constant 0 : i32
    %c0_i32_0 = arith.constant 0 : i32
    return %c0_i32 : i32
  }
  func.func @transform_6(%arg0: i32, %arg1: i32) -> i32 {
    %c0_i32 = arith.constant 0 : i32
    %c0_i32_0 = arith.constant 0 : i32
    return %c0_i32 : i32
  }
  func.func @transform_7(%arg0: i32, %arg1: i32) -> i32 {
    %c0_i32 = arith.constant 0 : i32
    %c0_i32_0 = arith.constant 0 : i32
    return %c0_i32 : i32
  }
  func.func @transform_8(%arg0: i32, %arg1: i32) -> i32 {
    %c0_i32 = arith.constant 0 : i32
    %c0_i32_0 = arith.constant 0 : i32
    return %c0_i32 : i32
  }
  func.func @transform_9(%arg0: i32, %arg1: i32) -> (i32, i32, i32, i32) {
    %c0_i32 = arith.constant 0 : i32
    %c0_i32_0 = arith.constant 0 : i32
    %c0_i32_1 = arith.constant 0 : i32
    return %arg0, %c0_i32, %arg1, %c0_i32_0 : i32, i32, i32, i32
  }
}

</mosaic_0001>

<llo_original>
// kernel: tpu_custom_call.1
$region0: #{tpu_custom_call.1}
  #allocation0 [shape = 'u32[]', space=smem, size = 0x4, offset = 0x4, fixed_abs, tag = 'smem constant byte address 0x4 - core index']
  #allocation1 [shape = 'u32[144,128]{1,0:T(1,128)}', space=vmem, size = 0x12000, scoped, tag = 'internal scratch']
  #allocation2 [shape = 'f32[1]{0:T(128)S(6)}', space=smem, size = 0x200, scoped, tag = 'scoped memory for tpu_custom_call.1']
  %s0 = inlined_call_operand.hbm [shape: f32[2,4,2,128], index: 0, kind: input, shape index: {}]
  %s1 = inlined_call_operand.hbm [shape: f32[2,4,2,128], index: 1, kind: input, shape index: {}]
  %s2 = inlined_call_operand.hbm [shape: f32[2,4,2,128], index: 2, kind: input, shape index: {}]
  %s3 = inlined_call_operand.vmem [shape: f32[48], index: 3, kind: input, shape index: {}]
  %s4 = inlined_call_operand.vmem [shape: f32[4], index: 4, kind: input, shape index: {}]
  %s5 = inlined_call_operand.vmem [shape: f32[4], index: 5, kind: input, shape index: {}]
  %s6 = inlined_call_operand.<no memory space> [shape: f32[1], index: 6, kind: input, shape index: {}]
  %s7 = inlined_call_operand.vmem [shape: f32[36], index: 7, kind: input, shape index: {}]
  %s8 = inlined_call_operand.vmem [shape: f32[3], index: 8, kind: input, shape index: {}]
  %s9 = inlined_call_operand.hbm [shape: f32[2,4,2,128], index: 9, kind: output, shape index: {}]
  %s10 = sld [smem:[#allocation0]]
  $region101: #{tpu_custom_call.1} parent=0
    _
  %s12 = ssub.s32 1, %s10
  %s13 = scalar_select 0, %s12, %s10
  %14 = sst [smem:[#allocation2]] %s6
  $region1: #{tpu_custom_call.1} parent=0
    #allocation3 [shape = 'u8[8192]{0}', space=vmem, size = 0x2000, scoped, tag = 'input window, operand 0']
    #allocation4 [shape = 's32[2]{0}', space=sflag, size = 0x8, scoped, tag = 'scoped memory for tpu_custom_call.1']
    #allocation5 [shape = 's32[2]{0}', space=sflag, size = 0x8, scoped, tag = 'scoped memory for tpu_custom_call.1']
    #allocation6 [shape = 's32[2]{0}', space=sflag, size = 0x8, scoped, tag = 'scoped memory for tpu_custom_call.1']
    #allocation7 [shape = 'u8[8192]{0}', space=vmem, size = 0x2000, scoped, tag = 'input window, operand 1']
    #allocation8 [shape = 's32[2]{0}', space=sflag, size = 0x8, scoped, tag = 'scoped memory for tpu_custom_call.1']
    #allocation9 [shape = 'u8[8192]{0}', space=vmem, size = 0x2000, scoped, tag = 'input window, operand 2']
    #allocation10 [shape = 'u8[512]{0}', space=smem, size = 0x200, scoped, tag = 'input window, operand 3, single buffered']
    #allocation11 [shape = 'u8[512]{0}', space=smem, size = 0x200, scoped, tag = 'input window, operand 4, single buffered']
    #allocation12 [shape = 's32[1]{0}', space=sflag, size = 0x4, scoped, tag = 'scoped memory for tpu_custom_call.1']
    #allocation13 [shape = 'u8[512]{0}', space=smem, size = 0x200, scoped, tag = 'input window, operand 5, single buffered']
    #allocation14 [shape = 'u8[512]{0}', space=smem, size = 0x200, scoped, tag = 'input window, operand 7, single buffered']
    #allocation15 [shape = 's32[1]{0}', space=sflag, size = 0x4, scoped, tag = 'scoped memory for tpu_custom_call.1']
    #allocation16 [shape = 'u8[512]{0}', space=smem, size = 0x200, scoped, tag = 'input window, operand 8, single buffered']
    #allocation17 [shape = 'u8[8192]{0}', space=vmem, size = 0x2000, scoped, tag = 'output window, operand 0']
    %15 = vsyncpa [#allocation4], 0
    %s16 = scalar_lea.sflag [#allocation4], 1
    %17 = vsyncpa %s16, 0
    %18 = vsyncpa [#allocation8], 0
    %s19 = scalar_lea.sflag [#allocation8], 1
    %20 = vsyncpa %s19, 0
    %21 = vsyncpa [#allocation6], 0
    %22 = vsyncpa [#allocation12], 0
    %23 = vsyncpa [#allocation15], 0
    %24 = vsyncpa [#allocation5], 0
    %s25 = scalar_lea.sflag [#allocation5], 1
    %26 = vsyncpa %s25, 0
    loop: start=0, step=1, limit=4
    $region2: #{tpu_custom_call.1} parent=1 // loop_pre_header
      _
    $region3: #{tpu_custom_call.1} parent=1 // loop_header
      %s28 = sphi 0, %s32
      %p29 = scmp.ge.s32.totalorder %s28, 4
      %s35 = sphi 0, %s47
      %s36 = sphi 0, %s43
      %s37 = sphi 0, %s35
      %s38 = sphi 0, %s36
      %s39 = sphi 0, %s37
      %s40 = sphi 0, %s38
      %s52 = sphi 0, %s54
      %s55 = sphi 0, %s52
      %s56 = sphi 0, %s55
      %s72 = sphi 0, %s56
      %s80 = sphi 0, %s82
      %s83 = sphi 0, %s80
      %s84 = sphi 0, %s83
      %s100 = sphi 0, %s84
      %s108 = sphi 0, %s110
      %s111 = sphi 0, %s108
      %s112 = sphi 0, %s111
      %s128 = sphi 0, %s112
      %s132 = sphi 0, %s132
      %s134 = sphi 0, %s132
      %s135 = sphi 0, %s134
      %s149 = sphi 0, %s135
      %s153 = sphi 0, %s153
      %s155 = sphi 0, %s153
      %s156 = sphi 0, %s155
      %s170 = sphi 0, %s156
      %s174 = sphi 0, %s174
      %s176 = sphi 0, %s174
      %s177 = sphi 0, %s176
      %s191 = sphi 0, %s177
      %s195 = sphi 0, %s195
      %s197 = sphi 0, %s195
      %s198 = sphi 0, %s197
      %s212 = sphi 0, %s198
      %s216 = sphi 0, %s216
      %s218 = sphi 0, %s216
      %s219 = sphi 0, %s218
      %s233 = sphi 0, %s219
      %s237 = sphi 0, %s237
      %s239 = sphi 0, %s237
      %s240 = sphi 0, %s239
      %s254 = sphi 0, %s240
      %s262 = sphi 0, %s264
      %s265 = sphi 0, %s262
      %s266 = sphi 0, %s265
      %s282 = sphi 0, %s266
    $region4: #{tpu_custom_call.1} parent=1 // loop_header_branch
      %31 = sbr.rel (%p29) target = $region8
    $region5: #{tpu_custom_call.1} parent=1 // loop_body
      %s33 = ssub.s32 %s28, 1
      %s34 = ssub.s32 %s28, 2
      %s41 = sadd.s32 1, %s36
      %p42 = scmp.ge.s32.totalorder %s41, 1
      %s43 = scalar_select %p42, 0, %s41
      %s44 = sadd.s32 1, %s35
      %s45 = scalar_select %p42, %s44, %s35
      %p46 = scmp.ge.s32.totalorder %s45, 2
      %s47 = scalar_select %p46, 0, %s45
      %s48 = ssub.s32 %s35, %s47
      %s49 = ssub.s32 %s36, %s43
      %s50 = sor.u32 %s48, %s49
      %p51 = scmp.eq.s32.totalorder %s50, 0
      %s53 = sadd.s32 %s52, 1
      %s54 = scalar_select %p51, %s52, %s53
      %p57 = pneg %p51
      %p58 = scmp.eq.s32.totalorder %s28, 1
      %p59 = por %p57, %p58
      %p60 = scmp.ne.s32.totalorder %s52, %s55
      %p61 = scmp.eq.s32.totalorder %s28, 0
      %p62 = por %p60, %p61
      %p63 = scmp.ne.s32.totalorder %s52, %s55
      %p64 = scmp.eq.s32.totalorder %s33, 1
      %p65 = por %p63, %p64
      %p66 = scmp.ne.s32.totalorder %s55, %s56
      %p67 = scmp.eq.s32.totalorder %s33, 0
      %p68 = por %p66, %p67
      %p69 = scmp.ne.s32.totalorder %s55, %s56
      %p70 = scmp.eq.s32.totalorder %s34, 1
      %p71 = por %p69, %p70
      %p73 = scmp.ne.s32.totalorder %s56, %s72
      %p74 = scmp.eq.s32.totalorder %s34, 0
      %p75 = por %p73, %p74
      %s76 = ssub.s32 %s35, %s47
      %s77 = ssub.s32 %s36, %s43
      %s78 = sor.u32 %s76, %s77
      %p79 = scmp.eq.s32.totalorder %s78, 0
      %s81 = sadd.s32 %s80, 1
      %s82 = scalar_select %p79, %s80, %s81
      %p85 = pneg %p79
      %p86 = scmp.eq.s32.totalorder %s28, 1
      %p87 = por %p85, %p86
      %p88 = scmp.ne.s32.totalorder %s80, %s83
      %p89 = scmp.eq.s32.totalorder %s28, 0
      %p90 = por %p88, %p89
      %p91 = scmp.ne.s32.totalorder %s80, %s83
      %p92 = scmp.eq.s32.totalorder %s33, 1
      %p93 = por %p91, %p92
      %p94 = scmp.ne.s32.totalorder %s83, %s84
      %p95 = scmp.eq.s32.totalorder %s33, 0
      %p96 = por %p94, %p95
      %p97 = scmp.ne.s32.totalorder %s83, %s84
      %p98 = scmp.eq.s32.totalorder %s34, 1
      %p99 = por %p97, %p98
      %p101 = scmp.ne.s32.totalorder %s84, %s100
      %p102 = scmp.eq.s32.totalorder %s34, 0
      %p103 = por %p101, %p102
      %s104 = ssub.s32 %s35, %s47
      %s105 = ssub.s32 %s36, %s43
      %s106 = sor.u32 %s104, %s105
      %p107 = scmp.eq.s32.totalorder %s106, 0
      %s109 = sadd.s32 %s108, 1
      %s110 = scalar_select %p107, %s108, %s109
      %p113 = pneg %p107
      %p114 = scmp.eq.s32.totalorder %s28, 1
      %p115 = por %p113, %p114
      %p116 = scmp.ne.s32.totalorder %s108, %s111
      %p117 = scmp.eq.s32.totalorder %s28, 0
      %p118 = por %p116, %p117
      %p119 = scmp.ne.s32.totalorder %s108, %s111
      %p120 = scmp.eq.s32.totalorder %s33, 1
      %p121 = por %p119, %p120
      %p122 = scmp.ne.s32.totalorder %s111, %s112
      %p123 = scmp.eq.s32.totalorder %s33, 0
      %p124 = por %p122, %p123
      %p125 = scmp.ne.s32.totalorder %s111, %s112
      %p126 = scmp.eq.s32.totalorder %s34, 1
      %p127 = por %p125, %p126
      %p129 = scmp.ne.s32.totalorder %s112, %s128
      %p130 = scmp.eq.s32.totalorder %s34, 0
      %p131 = por %p129, %p130
      %s133 = sadd.s32 %s132, 1
      %p136 = scmp.eq.s32.totalorder %s28, 1
      %p137 = scmp.ne.s32.totalorder %s132, %s134
      %p138 = scmp.eq.s32.totalorder %s28, 0
      %p139 = por %p137, %p138
      %p140 = scmp.ne.s32.totalorder %s132, %s134
      %p141 = scmp.eq.s32.totalorder %s33, 1
      %p142 = por %p140, %p141
      %p143 = scmp.ne.s32.totalorder %s134, %s135
      %p144 = scmp.eq.s32.totalorder %s33, 0
      %p145 = por %p143, %p144
      %p146 = scmp.ne.s32.totalorder %s134, %s135
      %p147 = scmp.eq.s32.totalorder %s34, 1
      %p148 = por %p146, %p147
      %p150 = scmp.ne.s32.totalorder %s135, %s149
      %p151 = scmp.eq.s32.totalorder %s34, 0
      %p152 = por %p150, %p151
      %s154 = sadd.s32 %s153, 1
      %p157 = scmp.eq.s32.totalorder %s28, 1
      %p158 = scmp.ne.s32.totalorder %s153, %s155
      %p159 = scmp.eq.s32.totalorder %s28, 0
      %p160 = por %p158, %p159
      %p161 = scmp.ne.s32.totalorder %s153, %s155
      %p162 = scmp.eq.s32.totalorder %s33, 1
      %p163 = por %p161, %p162
      %p164 = scmp.ne.s32.totalorder %s155, %s156
      %p165 = scmp.eq.s32.totalorder %s33, 0
      %p166 = por %p164, %p165
      %p167 = scmp.ne.s32.totalorder %s155, %s156
      %p168 = scmp.eq.s32.totalorder %s34, 1
      %p169 = por %p167, %p168
      %p171 = scmp.ne.s32.totalorder %s156, %s170
      %p172 = scmp.eq.s32.totalorder %s34, 0
      %p173 = por %p171, %p172
      %s175 = sadd.s32 %s174, 1
      %p178 = scmp.eq.s32.totalorder %s28, 1
      %p179 = scmp.ne.s32.totalorder %s174, %s176
      %p180 = scmp.eq.s32.totalorder %s28, 0
      %p181 = por %p179, %p180
      %p182 = scmp.ne.s32.totalorder %s174, %s176
      %p183 = scmp.eq.s32.totalorder %s33, 1
      %p184 = por %p182, %p183
      %p185 = scmp.ne.s32.totalorder %s176, %s177
      %p186 = scmp.eq.s32.totalorder %s33, 0
      %p187 = por %p185, %p186
      %p188 = scmp.ne.s32.totalorder %s176, %s177
      %p189 = scmp.eq.s32.totalorder %s34, 1
      %p190 = por %p188, %p189
      %p192 = scmp.ne.s32.totalorder %s177, %s191
      %p193 = scmp.eq.s32.totalorder %s34, 0
      %p194 = por %p192, %p193
      %s196 = sadd.s32 %s195, 1
      %p199 = scmp.eq.s32.totalorder %s28, 1
      %p200 = scmp.ne.s32.totalorder %s195, %s197
      %p201 = scmp.eq.s32.totalorder %s28, 0
      %p202 = por %p200, %p201
      %p203 = scmp.ne.s32.totalorder %s195, %s197
      %p204 = scmp.eq.s32.totalorder %s33, 1
      %p205 = por %p203, %p204
      %p206 = scmp.ne.s32.totalorder %s197, %s198
      %p207 = scmp.eq.s32.totalorder %s33, 0
      %p208 = por %p206, %p207
      %p209 = scmp.ne.s32.totalorder %s197, %s198
      %p210 = scmp.eq.s32.totalorder %s34, 1
      %p211 = por %p209, %p210
      %p213 = scmp.ne.s32.totalorder %s198, %s212
      %p214 = scmp.eq.s32.totalorder %s34, 0
      %p215 = por %p213, %p214
      %s217 = sadd.s32 %s216, 1
      %p220 = scmp.eq.s32.totalorder %s28, 1
      %p221 = scmp.ne.s32.totalorder %s216, %s218
      %p222 = scmp.eq.s32.totalorder %s28, 0
      %p223 = por %p221, %p222
      %p224 = scmp.ne.s32.totalorder %s216, %s218
      %p225 = scmp.eq.s32.totalorder %s33, 1
      %p226 = por %p224, %p225
      %p227 = scmp.ne.s32.totalorder %s218, %s219
      %p228 = scmp.eq.s32.totalorder %s33, 0
      %p229 = por %p227, %p228
      %p230 = scmp.ne.s32.totalorder %s218, %s219
      %p231 = scmp.eq.s32.totalorder %s34, 1
      %p232 = por %p230, %p231
      %p234 = scmp.ne.s32.totalorder %s219, %s233
      %p235 = scmp.eq.s32.totalorder %s34, 0
      %p236 = por %p234, %p235
      %s238 = sadd.s32 %s237, 1
      %p241 = scmp.eq.s32.totalorder %s28, 1
      %p242 = scmp.ne.s32.totalorder %s237, %s239
      %p243 = scmp.eq.s32.totalorder %s28, 0
      %p244 = por %p242, %p243
      %p245 = scmp.ne.s32.totalorder %s237, %s239
      %p246 = scmp.eq.s32.totalorder %s33, 1
      %p247 = por %p245, %p246
      %p248 = scmp.ne.s32.totalorder %s239, %s240
      %p249 = scmp.eq.s32.totalorder %s33, 0
      %p250 = por %p248, %p249
      %p251 = scmp.ne.s32.totalorder %s239, %s240
      %p252 = scmp.eq.s32.totalorder %s34, 1
      %p253 = por %p251, %p252
      %p255 = scmp.ne.s32.totalorder %s240, %s254
      %p256 = scmp.eq.s32.totalorder %s34, 0
      %p257 = por %p255, %p256
      %s258 = ssub.s32 %s35, %s47
      %s259 = ssub.s32 %s36, %s43
      %s260 = sor.u32 %s258, %s259
      %p261 = scmp.eq.s32.totalorder %s260, 0
      %s263 = sadd.s32 %s262, 1
      %s264 = scalar_select %p261, %s262, %s263
      %p267 = pneg %p261
      %p268 = scmp.eq.s32.totalorder %s28, 1
      %p269 = por %p267, %p268
      %p270 = scmp.ne.s32.totalorder %s262, %s265
      %p271 = scmp.eq.s32.totalorder %s28, 0
      %p272 = por %p270, %p271
      %p273 = scmp.ne.s32.totalorder %s262, %s265
      %p274 = scmp.eq.s32.totalorder %s33, 1
      %p275 = por %p273, %p274
      %p276 = scmp.ne.s32.totalorder %s265, %s266
      %p277 = scmp.eq.s32.totalorder %s33, 0
      %p278 = por %p276, %p277
      %p279 = scmp.ne.s32.totalorder %s265, %s266
      %p280 = scmp.eq.s32.totalorder %s34, 1
      %p281 = por %p279, %p280
      %p283 = scmp.ne.s32.totalorder %s266, %s282
      %p284 = scmp.eq.s32.totalorder %s34, 0
      %p285 = por %p283, %p284
      %p286 = scmp.le.s32.totalorder 1, %s28
      %p287 = scmp.lt.s32.totalorder %s28, 3
      %p288 = pnand %p286, %p287
      %p289 = pneg %p288
      // Predicated region
      $region9: #{tpu_custom_call.1} parent=5 // pred_check
        _
      $region10: #{tpu_custom_call.1} parent=5 // pred_check_branch
        %291 = sbr.rel (%p288) target = $region12
      $region11: #{tpu_custom_call.1} parent=5 // pred_region
        %s292 = ssub.s32 %s28, 1
        // Predicated region
        $region13: #{tpu_custom_call.1} parent=11 // pred_check
          %p293 = pneg %p145
        $region14: #{tpu_custom_call.1} parent=11 // pred_check_branch
          %295 = sbr.rel (%p293) target = $region16
        $region15: #{tpu_custom_call.1} parent=11 // pred_region
          %s297 = ssub.s32 16, 16
          %298 = vsyncadd [#allocation6], %s297
          %s300 = sshll.u32 %s3, 4
          %s301 = int_to_ptr.vmem [resolvable:$true] %s300
          %303 = dma.vmem_to_smem %s301, 16, [#allocation10], [#allocation6]
        $region16: #{tpu_custom_call.1} parent=11 // pred_fallthru
          _
        // Predicated region
        $region17: #{tpu_custom_call.1} parent=11 // pred_check
          %p304 = pneg %p166
        $region18: #{tpu_custom_call.1} parent=11 // pred_check_branch
          %306 = sbr.rel (%p304) target = $region20
        $region19: #{tpu_custom_call.1} parent=11 // pred_region
          %s308 = ssub.s32 16, 16
          %309 = vsyncadd [#allocation12], %s308
          %s311 = sshll.u32 %s4, 4
          %s312 = int_to_ptr.vmem [resolvable:$true] %s311
          %314 = dma.vmem_to_smem %s312, 16, [#allocation11], [#allocation12]
        $region20: #{tpu_custom_call.1} parent=11 // pred_fallthru
          _
        // Predicated region
        $region21: #{tpu_custom_call.1} parent=11 // pred_check
          %p315 = pneg %p187
        $region22: #{tpu_custom_call.1} parent=11 // pred_check_branch
          %317 = sbr.rel (%p315) target = $region24
        $region23: #{tpu_custom_call.1} parent=11 // pred_region
          %s319 = ssub.s32 16, 16
          %320 = vsyncadd [#allocation12], %s319
          %s322 = sshll.u32 %s5, 4
          %s323 = int_to_ptr.vmem [resolvable:$true] %s322
          %325 = dma.vmem_to_smem %s323, 16, [#allocation13], [#allocation12]
        $region24: #{tpu_custom_call.1} parent=11 // pred_fallthru
          _
        // Predicated region
        $region25: #{tpu_custom_call.1} parent=11 // pred_check
          %p326 = pneg %p208
        $region26: #{tpu_custom_call.1} parent=11 // pred_check_branch
          %328 = sbr.rel (%p326) target = $region28
        $region27: #{tpu_custom_call.1} parent=11 // pred_region
          _
        $region28: #{tpu_custom_call.1} parent=11 // pred_fallthru
          _
        // Predicated region
        $region29: #{tpu_custom_call.1} parent=11 // pred_check
          %p329 = pneg %p229
        $region30: #{tpu_custom_call.1} parent=11 // pred_check_branch
          %331 = sbr.rel (%p329) target = $region32
        $region31: #{tpu_custom_call.1} parent=11 // pred_region
          %s333 = ssub.s32 16, 16
          %334 = vsyncadd [#allocation15], %s333
          %s336 = sshll.u32 %s7, 4
          %s337 = int_to_ptr.vmem [resolvable:$true] %s336
          %339 = dma.vmem_to_smem %s337, 16, [#allocation14], [#allocation15]
        $region32: #{tpu_custom_call.1} parent=11 // pred_fallthru
          _
        // Predicated region
        $region33: #{tpu_custom_call.1} parent=11 // pred_check
          %p340 = pneg %p250
        $region34: #{tpu_custom_call.1} parent=11 // pred_check_branch
          %342 = sbr.rel (%p340) target = $region36
        $region35: #{tpu_custom_call.1} parent=11 // pred_region
          %s344 = ssub.s32 16, 16
          %345 = vsyncadd [#allocation15], %s344
          %s347 = sshll.u32 %s8, 4
          %s348 = int_to_ptr.vmem [resolvable:$true] %s347
          %350 = dma.vmem_to_smem %s348, 16, [#allocation16], [#allocation15]
        $region36: #{tpu_custom_call.1} parent=11 // pred_fallthru
          _
      $region12: #{tpu_custom_call.1} parent=5 // pred_fallthru
        _
      %p351 = scmp.lt.s32.totalorder %s28, 2
      // Predicated region
      $region37: #{tpu_custom_call.1} parent=5 // pred_check
        %p352 = pneg %p351
      $region38: #{tpu_custom_call.1} parent=5 // pred_check_branch
        %354 = sbr.rel (%p352) target = $region40
      $region39: #{tpu_custom_call.1} parent=5 // pred_region
        // Predicated region
        $region41: #{tpu_custom_call.1} parent=39 // pred_check
          %p355 = pneg %p62
        $region42: #{tpu_custom_call.1} parent=39 // pred_check_branch
          %357 = sbr.rel (%p355) target = $region44
        $region43: #{tpu_custom_call.1} parent=39 // pred_region
          %s358 = sand.u32 %s52, 1
          %s359 = scalar_lea.sflag [#allocation4], %s358
          %s360 = sand.u32 %s52, 1
          %s361 = smul.addr %s360, 8
          %s362 = scalar_lea.vmem [#allocation3], %s361
          %s364 = ssub.s32 128, 128
          %365 = vsyncadd %s359, %s364
          %s366 = smul.addr %s35, 4
          %s367 = sadd.s32 %s36, %s366
          %s368 = smul.addr %s367, 32
          %s369 = scalar_lea.hbm %s0, %s368
          %s370 = sshll.u32 %s362, 4
          %s371 = int_to_ptr.vmem [resolvable:$true] %s370
          %376 = dma.hbm_to_vmem [thread:$0]  %s369, 128, %s371, %s359, 32, 32, 2
        $region44: #{tpu_custom_call.1} parent=39 // pred_fallthru
          _
        // Predicated region
        $region45: #{tpu_custom_call.1} parent=39 // pred_check
          %p377 = pneg %p90
        $region46: #{tpu_custom_call.1} parent=39 // pred_check_branch
          %379 = sbr.rel (%p377) target = $region48
        $region47: #{tpu_custom_call.1} parent=39 // pred_region
          %s380 = sand.u32 %s28, 1
          %s381 = scalar_lea.sflag [#allocation8], %s380
          %s382 = sand.u32 %s80, 1
          %s383 = smul.addr %s382, 8
          %s384 = scalar_lea.vmem [#allocation7], %s383
          %s386 = ssub.s32 128, 128
          %387 = vsyncadd %s381, %s386
          %s388 = smul.addr %s35, 4
          %s389 = sadd.s32 %s36, %s388
          %s390 = smul.addr %s389, 32
          %s391 = scalar_lea.hbm %s1, %s390
          %s392 = sshll.u32 %s384, 4
          %s393 = int_to_ptr.vmem [resolvable:$true] %s392
          %398 = dma.hbm_to_vmem [thread:$0]  %s391, 128, %s393, %s381, 32, 32, 2
        $region48: #{tpu_custom_call.1} parent=39 // pred_fallthru
          _
        // Predicated region
        $region49: #{tpu_custom_call.1} parent=39 // pred_check
          %p399 = pneg %p118
        $region50: #{tpu_custom_call.1} parent=39 // pred_check_branch
          %401 = sbr.rel (%p399) target = $region52
        $region51: #{tpu_custom_call.1} parent=39 // pred_region
          %s402 = sand.u32 %s28, 1
          %s403 = scalar_lea.sflag [#allocation8], %s402
          %s404 = sand.u32 %s108, 1
          %s405 = smul.addr %s404, 8
          %s406 = scalar_lea.vmem [#allocation9], %s405
          %s408 = ssub.s32 128, 128
          %409 = vsyncadd %s403, %s408
          %s410 = smul.addr %s35, 4
          %s411 = sadd.s32 %s36, %s410
          %s412 = smul.addr %s411, 32
          %s413 = scalar_lea.hbm %s2, %s412
          %s414 = sshll.u32 %s406, 4
          %s415 = int_to_ptr.vmem [resolvable:$true] %s414
          %420 = dma.hbm_to_vmem [thread:$0]  %s413, 128, %s415, %s403, 32, 32, 2
        $region52: #{tpu_custom_call.1} parent=39 // pred_fallthru
          _
      $region40: #{tpu_custom_call.1} parent=5 // pred_fallthru
        _
      %p421 = scmp.le.s32.totalorder 1, %s28
      %p422 = scmp.lt.s32.totalorder %s28, 3
      %p423 = pnand %p421, %p422
      %p424 = pneg %p423
      // Predicated region
      $region53: #{tpu_custom_call.1} parent=5 // pred_check
        _
      $region54: #{tpu_custom_call.1} parent=5 // pred_check_branch
        %426 = sbr.rel (%p423) target = $region56
      $region55: #{tpu_custom_call.1} parent=5 // pred_region
        %s427 = ssub.s32 %s28, 1
        %s428 = sand.u32 %s55, 1
        %s429 = scalar_lea.sflag [#allocation4], %s428
        %s430 = sand.u32 %s55, 1
        %s431 = smul.addr %s430, 8
        %s432 = scalar_lea.vmem [#allocation3], %s431
        // Predicated region
        $region57: #{tpu_custom_call.1} parent=55 // pred_check
          %p433 = pneg %p68
        $region58: #{tpu_custom_call.1} parent=55 // pred_check_branch
          %435 = sbr.rel (%p433) target = $region60
        $region59: #{tpu_custom_call.1} parent=55 // pred_region
          %436 = dma.done %s429, 128
        $region60: #{tpu_custom_call.1} parent=55 // pred_fallthru
          _
        %s437 = sand.u32 %s33, 1
        %s438 = scalar_lea.sflag [#allocation8], %s437
        %s439 = sand.u32 %s83, 1
        %s440 = smul.addr %s439, 8
        %s441 = scalar_lea.vmem [#allocation7], %s440
        // Predicated region
        $region61: #{tpu_custom_call.1} parent=55 // pred_check
          %p442 = pneg %p96
        $region62: #{tpu_custom_call.1} parent=55 // pred_check_branch
          %444 = sbr.rel (%p442) target = $region64
        $region63: #{tpu_custom_call.1} parent=55 // pred_region
          %445 = dma.done %s438, 128
        $region64: #{tpu_custom_call.1} parent=55 // pred_fallthru
          _
        %s446 = sand.u32 %s33, 1
        %s447 = scalar_lea.sflag [#allocation8], %s446
        %s448 = sand.u32 %s111, 1
        %s449 = smul.addr %s448, 8
        %s450 = scalar_lea.vmem [#allocation9], %s449
        // Predicated region
        $region65: #{tpu_custom_call.1} parent=55 // pred_check
          %p451 = pneg %p124
        $region66: #{tpu_custom_call.1} parent=55 // pred_check_branch
          %453 = sbr.rel (%p451) target = $region68
        $region67: #{tpu_custom_call.1} parent=55 // pred_region
          %454 = dma.done %s447, 128
        $region68: #{tpu_custom_call.1} parent=55 // pred_fallthru
          _
        // Predicated region
        $region69: #{tpu_custom_call.1} parent=55 // pred_check
          %p455 = pneg %p145
        $region70: #{tpu_custom_call.1} parent=55 // pred_check_branch
          %457 = sbr.rel (%p455) target = $region72
        $region71: #{tpu_custom_call.1} parent=55 // pred_region
          %458 = dma.done [#allocation6], 16
        $region72: #{tpu_custom_call.1} parent=55 // pred_fallthru
          _
        // Predicated region
        $region73: #{tpu_custom_call.1} parent=55 // pred_check
          %p459 = pneg %p166
        $region74: #{tpu_custom_call.1} parent=55 // pred_check_branch
          %461 = sbr.rel (%p459) target = $region76
        $region75: #{tpu_custom_call.1} parent=55 // pred_region
          %462 = dma.done [#allocation12], 16
        $region76: #{tpu_custom_call.1} parent=55 // pred_fallthru
          _
        // Predicated region
        $region77: #{tpu_custom_call.1} parent=55 // pred_check
          %p463 = pneg %p187
        $region78: #{tpu_custom_call.1} parent=55 // pred_check_branch
          %465 = sbr.rel (%p463) target = $region80
        $region79: #{tpu_custom_call.1} parent=55 // pred_region
          %466 = dma.done [#allocation12], 16
        $region80: #{tpu_custom_call.1} parent=55 // pred_fallthru
          _
        // Predicated region
        $region81: #{tpu_custom_call.1} parent=55 // pred_check
          %p467 = pneg %p229
        $region82: #{tpu_custom_call.1} parent=55 // pred_check_branch
          %469 = sbr.rel (%p467) target = $region84
        $region83: #{tpu_custom_call.1} parent=55 // pred_region
          %470 = dma.done [#allocation15], 16
        $region84: #{tpu_custom_call.1} parent=55 // pred_fallthru
          _
        // Predicated region
        $region85: #{tpu_custom_call.1} parent=55 // pred_check
          %p471 = pneg %p250
        $region86: #{tpu_custom_call.1} parent=55 // pred_check_branch
          %473 = sbr.rel (%p471) target = $region88
        $region87: #{tpu_custom_call.1} parent=55 // pred_region
          %474 = dma.done [#allocation15], 16
        $region88: #{tpu_custom_call.1} parent=55 // pred_fallthru
          _
        %475 = sfence
        %s476 = sand.u32 %s55, 1
        %s477 = scalar_lea.sflag [#allocation4], %s476
        %s478 = sand.u32 %s55, 1
        %s479 = smul.addr %s478, 8
        %s480 = scalar_lea.vmem [#allocation3], %s479
        %p481 = pneg %p68
        %p482 = pneg %p65
        %s483 = sand.u32 %s33, 1
        %s484 = scalar_lea.sflag [#allocation8], %s483
        %s485 = sand.u32 %s83, 1
        %s486 = smul.addr %s485, 8
        %s487 = scalar_lea.vmem [#allocation7], %s486
        %p488 = pneg %p96
        %p489 = pneg %p93
        %s490 = sand.u32 %s33, 1
        %s491 = scalar_lea.sflag [#allocation8], %s490
        %s492 = sand.u32 %s111, 1
        %s493 = smul.addr %s492, 8
        %s494 = scalar_lea.vmem [#allocation9], %s493
        %p495 = pneg %p124
        %p496 = pneg %p121
        %p497 = pneg %p145
        %p498 = pneg %p142
        %p499 = pneg %p166
        %p500 = pneg %p163
        %p501 = pneg %p187
        %p502 = pneg %p184
        %p503 = pneg %p208
        %p504 = pneg %p205
        %p505 = pneg %p229
        %p506 = pneg %p226
        %p507 = pneg %p250
        %p508 = pneg %p247
        %p509 = pneg %p278
        %p510 = pneg %p275
        %s511 = sand.u32 %s265, 1
        %s512 = scalar_lea.sflag [#allocation5], %s511
        %s513 = sand.u32 %s265, 1
        %s514 = smul.addr %s513, 8
        %s515 = scalar_lea.vmem [#allocation17], %s514
        %v516 = vld [vmem:[%s432] sm:$0x3]
        %s517 = scalar_lea.vmem %s432, 2 [#allocation3]
        %v518 = vld [vmem:[%s517] sm:$0x3]
        %s519 = scalar_lea.vmem %s432, 4 [#allocation3]
        %v520 = vld [vmem:[%s519] sm:$0x3]
        %s521 = scalar_lea.vmem %s432, 6 [#allocation3]
        %v522 = vld [vmem:[%s521] sm:$0x3]
        %v523 = vld [vmem:[%s441] sm:$0x3]
        %s524 = scalar_lea.vmem %s441, 2 [#allocation7]
        %v525 = vld [vmem:[%s524] sm:$0x3]
        %s526 = scalar_lea.vmem %s441, 4 [#allocation7]
        %v527 = vld [vmem:[%s526] sm:$0x3]
        %s528 = scalar_lea.vmem %s441, 6 [#allocation7]
        %v529 = vld [vmem:[%s528] sm:$0x3]
        %v530 = vld [vmem:[%s450] sm:$0x3]
        %s531 = scalar_lea.vmem %s450, 2 [#allocation9]
        %v532 = vld [vmem:[%s531] sm:$0x3]
        %s533 = scalar_lea.vmem %s450, 4 [#allocation9]
        %v534 = vld [vmem:[%s533] sm:$0x3]
        %s535 = scalar_lea.vmem %s450, 6 [#allocation9]
        %v536 = vld [vmem:[%s535] sm:$0x3]
        %s537 = sld [smem:[#allocation10]]
        %v538 = vstv %s537
        %v539 = vmul.f32 %v538, %v516
        %s540 = sld [smem:[#allocation10 + $0x1]]
        %v541 = vstv %s540
        %v542 = vmul.f32 %v541, %v518
        %v543 = vadd.f32 %v539, %v542
        %s544 = sld [smem:[#allocation10 + $0x2]]
        %v545 = vstv %s544
        %v546 = vmul.f32 %v545, %v520
        %v547 = vadd.f32 %v543, %v546
        %s548 = sld [smem:[#allocation10 + $0x3]]
        %v549 = vstv %s548
        %v550 = vmul.f32 %v549, %v522
        %v551 = vadd.f32 %v547, %v550
        %s552 = sld [smem:[#allocation10 + $0x10]]
        %v553 = vstv %s552
        %v554 = vmul.f32 %v553, %v523
        %v555 = vadd.f32 %v551, %v554
        %s556 = sld [smem:[#allocation10 + $0x11]]
        %v557 = vstv %s556
        %v558 = vmul.f32 %v557, %v525
        %v559 = vadd.f32 %v555, %v558
        %s560 = sld [smem:[#allocation10 + $0x12]]
        %v561 = vstv %s560
        %v562 = vmul.f32 %v561, %v527
        %v563 = vadd.f32 %v559, %v562
        %s564 = sld [smem:[#allocation10 + $0x13]]
        %v565 = vstv %s564
        %v566 = vmul.f32 %v565, %v529
        %v567 = vadd.f32 %v563, %v566
        %s568 = sld [smem:[#allocation10 + $0x20]]
        %v569 = vstv %s568
        %v570 = vmul.f32 %v569, %v530
        %v571 = vadd.f32 %v567, %v570
        %s572 = sld [smem:[#allocation10 + $0x21]]
        %v573 = vstv %s572
        %v574 = vmul.f32 %v573, %v532
        %v575 = vadd.f32 %v571, %v574
        %s576 = sld [smem:[#allocation10 + $0x22]]
        %v577 = vstv %s576
        %v578 = vmul.f32 %v577, %v534
        %v579 = vadd.f32 %v575, %v578
        %s580 = sld [smem:[#allocation10 + $0x23]]
        %v581 = vstv %s580
        %v582 = vmul.f32 %v581, %v536
        %v583 = vadd.f32 %v579, %v582
        %s584 = sld [smem:[#allocation11]]
        %v585 = vstv %s584
        %v586 = vadd.f32 %v583, %v585
        %v587 = vmax.f32 %v586, 0.0
        %s588 = sld [smem:[#allocation10 + $0x4]]
        %v589 = vstv %s588
        %v590 = vmul.f32 %v589, %v516
        %s591 = sld [smem:[#allocation10 + $0x5]]
        %v592 = vstv %s591
        %v593 = vmul.f32 %v592, %v518
        %v594 = vadd.f32 %v590, %v593
        %s595 = sld [smem:[#allocation10 + $0x6]]
        %v596 = vstv %s595
        %v597 = vmul.f32 %v596, %v520
        %v598 = vadd.f32 %v594, %v597
        %s599 = sld [smem:[#allocation10 + $0x7]]
        %v600 = vstv %s599
        %v601 = vmul.f32 %v600, %v522
        %v602 = vadd.f32 %v598, %v601
        %s603 = sld [smem:[#allocation10 + $0x14]]
        %v604 = vstv %s603
        %v605 = vmul.f32 %v604, %v523
        %v606 = vadd.f32 %v602, %v605
        %s607 = sld [smem:[#allocation10 + $0x15]]
        %v608 = vstv %s607
        %v609 = vmul.f32 %v608, %v525
        %v610 = vadd.f32 %v606, %v609
        %s611 = sld [smem:[#allocation10 + $0x16]]
        %v612 = vstv %s611
        %v613 = vmul.f32 %v612, %v527
        %v614 = vadd.f32 %v610, %v613
        %s615 = sld [smem:[#allocation10 + $0x17]]
        %v616 = vstv %s615
        %v617 = vmul.f32 %v616, %v529
        %v618 = vadd.f32 %v614, %v617
        %s619 = sld [smem:[#allocation10 + $0x24]]
        %v620 = vstv %s619
        %v621 = vmul.f32 %v620, %v530
        %v622 = vadd.f32 %v618, %v621
        %s623 = sld [smem:[#allocation10 + $0x25]]
        %v624 = vstv %s623
        %v625 = vmul.f32 %v624, %v532
        %v626 = vadd.f32 %v622, %v625
        %s627 = sld [smem:[#allocation10 + $0x26]]
        %v628 = vstv %s627
        %v629 = vmul.f32 %v628, %v534
        %v630 = vadd.f32 %v626, %v629
        %s631 = sld [smem:[#allocation10 + $0x27]]
        %v632 = vstv %s631
        %v633 = vmul.f32 %v632, %v536
        %v634 = vadd.f32 %v630, %v633
        %s635 = sld [smem:[#allocation11 + $0x1]]
        %v636 = vstv %s635
        %v637 = vadd.f32 %v634, %v636
        %v638 = vmax.f32 %v637, 0.0
        %s639 = sld [smem:[#allocation10 + $0x8]]
        %v640 = vstv %s639
        %v641 = vmul.f32 %v640, %v516
        %s642 = sld [smem:[#allocation10 + $0x9]]
        %v643 = vstv %s642
        %v644 = vmul.f32 %v643, %v518
        %v645 = vadd.f32 %v641, %v644
        %s646 = sld [smem:[#allocation10 + $0xa]]
        %v647 = vstv %s646
        %v648 = vmul.f32 %v647, %v520
        %v649 = vadd.f32 %v645, %v648
        %s650 = sld [smem:[#allocation10 + $0xb]]
        %v651 = vstv %s650
        %v652 = vmul.f32 %v651, %v522
        %v653 = vadd.f32 %v649, %v652
        %s654 = sld [smem:[#allocation10 + $0x18]]
        %v655 = vstv %s654
        %v656 = vmul.f32 %v655, %v523
        %v657 = vadd.f32 %v653, %v656
        %s658 = sld [smem:[#allocation10 + $0x19]]
        %v659 = vstv %s658
        %v660 = vmul.f32 %v659, %v525
        %v661 = vadd.f32 %v657, %v660
        %s662 = sld [smem:[#allocation10 + $0x1a]]
        %v663 = vstv %s662
        %v664 = vmul.f32 %v663, %v527
        %v665 = vadd.f32 %v661, %v664
        %s666 = sld [smem:[#allocation10 + $0x1b]]
        %v667 = vstv %s666
        %v668 = vmul.f32 %v667, %v529
        %v669 = vadd.f32 %v665, %v668
        %s670 = sld [smem:[#allocation10 + $0x28]]
        %v671 = vstv %s670
        %v672 = vmul.f32 %v671, %v530
        %v673 = vadd.f32 %v669, %v672
        %s674 = sld [smem:[#allocation10 + $0x29]]
        %v675 = vstv %s674
        %v676 = vmul.f32 %v675, %v532
        %v677 = vadd.f32 %v673, %v676
        %s678 = sld [smem:[#allocation10 + $0x2a]]
        %v679 = vstv %s678
        %v680 = vmul.f32 %v679, %v534
        %v681 = vadd.f32 %v677, %v680
        %s682 = sld [smem:[#allocation10 + $0x2b]]
        %v683 = vstv %s682
        %v684 = vmul.f32 %v683, %v536
        %v685 = vadd.f32 %v681, %v684
        %s686 = sld [smem:[#allocation11 + $0x2]]
        %v687 = vstv %s686
        %v688 = vadd.f32 %v685, %v687
        %v689 = vmax.f32 %v688, 0.0
        %s690 = sld [smem:[#allocation10 + $0xc]]
        %v691 = vstv %s690
        %v692 = vmul.f32 %v691, %v516
        %s693 = sld [smem:[#allocation10 + $0xd]]
        %v694 = vstv %s693
        %v695 = vmul.f32 %v694, %v518
        %v696 = vadd.f32 %v692, %v695
        %s697 = sld [smem:[#allocation10 + $0xe]]
        %v698 = vstv %s697
        %v699 = vmul.f32 %v698, %v520
        %v700 = vadd.f32 %v696, %v699
        %s701 = sld [smem:[#allocation10 + $0xf]]
        %v702 = vstv %s701
        %v703 = vmul.f32 %v702, %v522
        %v704 = vadd.f32 %v700, %v703
        %s705 = sld [smem:[#allocation10 + $0x1c]]
        %v706 = vstv %s705
        %v707 = vmul.f32 %v706, %v523
        %v708 = vadd.f32 %v704, %v707
        %s709 = sld [smem:[#allocation10 + $0x1d]]
        %v710 = vstv %s709
        %v711 = vmul.f32 %v710, %v525
        %v712 = vadd.f32 %v708, %v711
        %s713 = sld [smem:[#allocation10 + $0x1e]]
        %v714 = vstv %s713
        %v715 = vmul.f32 %v714, %v527
        %v716 = vadd.f32 %v712, %v715
        %s717 = sld [smem:[#allocation10 + $0x1f]]
        %v718 = vstv %s717
        %v719 = vmul.f32 %v718, %v529
        %v720 = vadd.f32 %v716, %v719
        %s721 = sld [smem:[#allocation10 + $0x2c]]
        %v722 = vstv %s721
        %v723 = vmul.f32 %v722, %v530
        %v724 = vadd.f32 %v720, %v723
        %s725 = sld [smem:[#allocation10 + $0x2d]]
        %v726 = vstv %s725
        %v727 = vmul.f32 %v726, %v532
        %v728 = vadd.f32 %v724, %v727
        %s729 = sld [smem:[#allocation10 + $0x2e]]
        %v730 = vstv %s729
        %v731 = vmul.f32 %v730, %v534
        %v732 = vadd.f32 %v728, %v731
        %s733 = sld [smem:[#allocation10 + $0x2f]]
        %v734 = vstv %s733
        %v735 = vmul.f32 %v734, %v536
        %v736 = vadd.f32 %v732, %v735
        %s737 = sld [smem:[#allocation11 + $0x3]]
        %v738 = vstv %s737
        %v739 = vadd.f32 %v736, %v738
        %v740 = vmax.f32 %v739, 0.0
        %s741 = sld [smem:[#allocation13]]
        %v742 = vstv %s741
        %v743 = vmul.f32 %v742, %v587
        %s744 = sld [smem:[#allocation13 + $0x1]]
        %v745 = vstv %s744
        %v746 = vmul.f32 %v745, %v638
        %v747 = vadd.f32 %v743, %v746
        %s748 = sld [smem:[#allocation13 + $0x2]]
        %v749 = vstv %s748
        %v750 = vmul.f32 %v749, %v689
        %v751 = vadd.f32 %v747, %v750
        %s752 = sld [smem:[#allocation13 + $0x3]]
        %v753 = vstv %s752
        %v754 = vmul.f32 %v753, %v740
        %v755 = vadd.f32 %v751, %v754
        %s756 = sld [smem:[#allocation2]]
        %v757 = vstv %s756
        %v758 = vadd.f32 %v755, %v757
        %v759 = vxor.u32 %v758, 2147483648
        %v760 = vmul.f32 %v759, 1.442695
        %v761 = vpow.pop %v760
        %v762 = vadd.f32 %v761, 1.0
        %v763 = vrcp.pop %v762
        %v764 = vmul.f32 1.0, %v763
        %s765 = sld [smem:[#allocation14]]
        %v766 = vstv %s765
        %v767 = vmul.f32 %v766, %v516
        %s768 = sld [smem:[#allocation14 + $0x1]]
        %v769 = vstv %s768
        %v770 = vmul.f32 %v769, %v518
        %v771 = vadd.f32 %v767, %v770
        %s772 = sld [smem:[#allocation14 + $0x2]]
        %v773 = vstv %s772
        %v774 = vmul.f32 %v773, %v520
        %v775 = vadd.f32 %v771, %v774
        %s776 = sld [smem:[#allocation14 + $0x3]]
        %v777 = vstv %s776
        %v778 = vmul.f32 %v777, %v522
        %v779 = vadd.f32 %v775, %v778
        %s780 = sld [smem:[#allocation14 + $0xc]]
        %v781 = vstv %s780
        %v782 = vmul.f32 %v781, %v523
        %v783 = vadd.f32 %v779, %v782
        %s784 = sld [smem:[#allocation14 + $0xd]]
        %v785 = vstv %s784
        %v786 = vmul.f32 %v785, %v525
        %v787 = vadd.f32 %v783, %v786
        %s788 = sld [smem:[#allocation14 + $0xe]]
        %v789 = vstv %s788
        %v790 = vmul.f32 %v789, %v527
        %v791 = vadd.f32 %v787, %v790
        %s792 = sld [smem:[#allocation14 + $0xf]]
        %v793 = vstv %s792
        %v794 = vmul.f32 %v793, %v529
        %v795 = vadd.f32 %v791, %v794
        %s796 = sld [smem:[#allocation14 + $0x18]]
        %v797 = vstv %s796
        %v798 = vmul.f32 %v797, %v530
        %v799 = vadd.f32 %v795, %v798
        %s800 = sld [smem:[#allocation14 + $0x19]]
        %v801 = vstv %s800
        %v802 = vmul.f32 %v801, %v532
        %v803 = vadd.f32 %v799, %v802
        %s804 = sld [smem:[#allocation14 + $0x1a]]
        %v805 = vstv %s804
        %v806 = vmul.f32 %v805, %v534
        %v807 = vadd.f32 %v803, %v806
        %s808 = sld [smem:[#allocation14 + $0x1b]]
        %v809 = vstv %s808
        %v810 = vmul.f32 %v809, %v536
        %v811 = vadd.f32 %v807, %v810
        %v812 = vmul.f32 %v764, %v811
        %s813 = sld [smem:[#allocation16]]
        %v814 = vstv %s813
        %v815 = vadd.f32 %v812, %v814
        %s816 = sld [smem:[#allocation14 + $0x4]]
        %v817 = vstv %s816
        %v818 = vmul.f32 %v817, %v516
        %s819 = sld [smem:[#allocation14 + $0x5]]
        %v820 = vstv %s819
        %v821 = vmul.f32 %v820, %v518
        %v822 = vadd.f32 %v818, %v821
        %s823 = sld [smem:[#allocation14 + $0x6]]
        %v824 = vstv %s823
        %v825 = vmul.f32 %v824, %v520
        %v826 = vadd.f32 %v822, %v825
        %s827 = sld [smem:[#allocation14 + $0x7]]
        %v828 = vstv %s827
        %v829 = vmul.f32 %v828, %v522
        %v830 = vadd.f32 %v826, %v829
        %s831 = sld [smem:[#allocation14 + $0x10]]
        %v832 = vstv %s831
        %v833 = vmul.f32 %v832, %v523
        %v834 = vadd.f32 %v830, %v833
        %s835 = sld [smem:[#allocation14 + $0x11]]
        %v836 = vstv %s835
        %v837 = vmul.f32 %v836, %v525
        %v838 = vadd.f32 %v834, %v837
        %s839 = sld [smem:[#allocation14 + $0x12]]
        %v840 = vstv %s839
        %v841 = vmul.f32 %v840, %v527
        %v842 = vadd.f32 %v838, %v841
        %s843 = sld [smem:[#allocation14 + $0x13]]
        %v844 = vstv %s843
        %v845 = vmul.f32 %v844, %v529
        %v846 = vadd.f32 %v842, %v845
        %s847 = sld [smem:[#allocation14 + $0x1c]]
        %v848 = vstv %s847
        %v849 = vmul.f32 %v848, %v530
        %v850 = vadd.f32 %v846, %v849
        %s851 = sld [smem:[#allocation14 + $0x1d]]
        %v852 = vstv %s851
        %v853 = vmul.f32 %v852, %v532
        %v854 = vadd.f32 %v850, %v853
        %s855 = sld [smem:[#allocation14 + $0x1e]]
        %v856 = vstv %s855
        %v857 = vmul.f32 %v856, %v534
        %v858 = vadd.f32 %v854, %v857
        %s859 = sld [smem:[#allocation14 + $0x1f]]
        %v860 = vstv %s859
        %v861 = vmul.f32 %v860, %v536
        %v862 = vadd.f32 %v858, %v861
        %v863 = vmul.f32 %v764, %v862
        %s864 = sld [smem:[#allocation16 + $0x1]]
        %v865 = vstv %s864
        %v866 = vadd.f32 %v863, %v865
        %s867 = sld [smem:[#allocation14 + $0x8]]
        %v868 = vstv %s867
        %v869 = vmul.f32 %v868, %v516
        %s870 = sld [smem:[#allocation14 + $0x9]]
        %v871 = vstv %s870
        %v872 = vmul.f32 %v871, %v518
        %v873 = vadd.f32 %v869, %v872
        %s874 = sld [smem:[#allocation14 + $0xa]]
        %v875 = vstv %s874
        %v876 = vmul.f32 %v875, %v520
        %v877 = vadd.f32 %v873, %v876
        %s878 = sld [smem:[#allocation14 + $0xb]]
        %v879 = vstv %s878
        %v880 = vmul.f32 %v879, %v522
        %v881 = vadd.f32 %v877, %v880
        %s882 = sld [smem:[#allocation14 + $0x14]]
        %v883 = vstv %s882
        %v884 = vmul.f32 %v883, %v523
        %v885 = vadd.f32 %v881, %v884
        %s886 = sld [smem:[#allocation14 + $0x15]]
        %v887 = vstv %s886
        %v888 = vmul.f32 %v887, %v525
        %v889 = vadd.f32 %v885, %v888
        %s890 = sld [smem:[#allocation14 + $0x16]]
        %v891 = vstv %s890
        %v892 = vmul.f32 %v891, %v527
        %v893 = vadd.f32 %v889, %v892
        %s894 = sld [smem:[#allocation14 + $0x17]]
        %v895 = vstv %s894
        %v896 = vmul.f32 %v895, %v529
        %v897 = vadd.f32 %v893, %v896
        %s898 = sld [smem:[#allocation14 + $0x20]]
        %v899 = vstv %s898
        %v900 = vmul.f32 %v899, %v530
        %v901 = vadd.f32 %v897, %v900
        %s902 = sld [smem:[#allocation14 + $0x21]]
        %v903 = vstv %s902
        %v904 = vmul.f32 %v903, %v532
        %v905 = vadd.f32 %v901, %v904
        %s906 = sld [smem:[#allocation14 + $0x22]]
        %v907 = vstv %s906
        %v908 = vmul.f32 %v907, %v534
        %v909 = vadd.f32 %v905, %v908
        %s910 = sld [smem:[#allocation14 + $0x23]]
        %v911 = vstv %s910
        %v912 = vmul.f32 %v911, %v536
        %v913 = vadd.f32 %v909, %v912
        %v914 = vmul.f32 %v764, %v913
        %s915 = sld [smem:[#allocation16 + $0x2]]
        %v916 = vstv %s915
        %v917 = vadd.f32 %v914, %v916
        %v918 = vmax.f32 %v815, %v866
        %v919 = vmax.f32 %v918, %v917
        %v920 = vsub.f32 %v815, %v919
        %v921 = vmul.f32 %v920, 1.442695
        %v922 = vpow.pop %v921
        %v923 = vsub.f32 %v866, %v919
        %v924 = vmul.f32 %v923, 1.442695
        %v925 = vpow.pop %v924
        %v926 = vsub.f32 %v917, %v919
        %v927 = vmul.f32 %v926, 1.442695
        %v928 = vpow.pop %v927
        %v929 = vadd.f32 %v922, %v925
        %v930 = vadd.f32 %v929, %v928
        %v931 = vrcp.pop %v930
        %v932 = vmul.f32 %v764, %v931
        %v933 = vmul.f32 %v922, %v932
        %v934 = vmul.f32 %v925, %v932
        %v935 = vmul.f32 %v928, %v932
        %v936 = vmul.f32 %v933, %v516
        %v937 = vmul.f32 %v934, %v523
        %v938 = vadd.f32 %v936, %v937
        %v939 = vmul.f32 %v935, %v530
        %v940 = vadd.f32 %v938, %v939
        %941 = vst [vmem:[%s515] sm:$0x3] %v940
        %v942 = vmul.f32 %v933, %v518
        %v943 = vmul.f32 %v934, %v525
        %v944 = vadd.f32 %v942, %v943
        %v945 = vmul.f32 %v935, %v532
        %v946 = vadd.f32 %v944, %v945
        %s947 = scalar_lea.vmem %s515, 2 [#allocation17]
        %948 = vst [vmem:[%s947] sm:$0x3] %v946
        %v949 = vmul.f32 %v933, %v520
        %v950 = vmul.f32 %v934, %v527
        %v951 = vadd.f32 %v949, %v950
        %v952 = vmul.f32 %v935, %v534
        %v953 = vadd.f32 %v951, %v952
        %s954 = scalar_lea.vmem %s515, 4 [#allocation17]
        %955 = vst [vmem:[%s954] sm:$0x3] %v953
        %v956 = vmul.f32 %v933, %v522
        %v957 = vmul.f32 %v934, %v529
        %v958 = vadd.f32 %v956, %v957
        %v959 = vmul.f32 %v935, %v536
        %v960 = vadd.f32 %v958, %v959
        %s961 = scalar_lea.vmem %s515, 6 [#allocation17]
        %962 = vst [vmem:[%s961] sm:$0x3] %v960
        %s963 = sand.u32 %s265, 1
        %s964 = scalar_lea.sflag [#allocation5], %s963
        %s965 = sand.u32 %s265, 1
        %s966 = smul.addr %s965, 8
        %s967 = scalar_lea.vmem [#allocation17], %s966
        // Predicated region
        $region89: #{tpu_custom_call.1} parent=55 // pred_check
          %p968 = pneg %p275
        $region90: #{tpu_custom_call.1} parent=55 // pred_check_branch
          %970 = sbr.rel (%p968) target = $region92
        $region91: #{tpu_custom_call.1} parent=55 // pred_region
          %s972 = ssub.s32 128, 128
          %973 = vsyncadd %s964, %s972
          %s974 = smul.addr %s37, 4
          %s975 = sadd.s32 %s38, %s974
          %s976 = smul.addr %s975, 32
          %s977 = scalar_lea.hbm %s9, %s976
          %s978 = sshll.u32 %s967, 4
          %s979 = int_to_ptr.vmem [resolvable:$true] %s978
          %984 = dma.vmem_to_hbm [thread:$0]  %s979, 128, %s977, %s964, 32, 32, 2
        $region92: #{tpu_custom_call.1} parent=55 // pred_fallthru
          _
      $region56: #{tpu_custom_call.1} parent=5 // pred_fallthru
        _
      %p985 = scmp.le.s32.totalorder 2, %s28
      // Predicated region
      $region93: #{tpu_custom_call.1} parent=5 // pred_check
        %p986 = pneg %p985
      $region94: #{tpu_custom_call.1} parent=5 // pred_check_branch
        %988 = sbr.rel (%p986) target = $region96
      $region95: #{tpu_custom_call.1} parent=5 // pred_region
        %s989 = ssub.s32 %s28, 2
        // Predicated region
        $region97: #{tpu_custom_call.1} parent=95 // pred_check
          %p990 = pneg %p281
        $region98: #{tpu_custom_call.1} parent=95 // pred_check_branch
          %992 = sbr.rel (%p990) target = $region100
        $region99: #{tpu_custom_call.1} parent=95 // pred_region
          %s993 = sand.u32 %s266, 1
          %s994 = scalar_lea.sflag [#allocation5], %s993
          %s995 = sand.u32 %s266, 1
          %s996 = smul.addr %s995, 8
          %s997 = scalar_lea.vmem [#allocation17], %s996
          %998 = dma.done %s994, 128
        $region100: #{tpu_custom_call.1} parent=95 // pred_fallthru
          _
      $region96: #{tpu_custom_call.1} parent=5 // pred_fallthru
        _
    $region6: #{tpu_custom_call.1} parent=1 // loop_footer
      %s32 = sadd.s32 1, %s28
    $region7: #{tpu_custom_call.1} parent=1 // loop_footer_branch
      %27 = sbr.rel target = $region3
    $region8: #{tpu_custom_call.1} parent=1 // loop_exit
      _
    %999 = vsyncpa [#allocation4], 1
    %s1000 = scalar_lea.sflag [#allocation4], 1
    %1001 = vsyncpa %s1000, 1
    %1002 = vsyncpa [#allocation8], 1
    %s1003 = scalar_lea.sflag [#allocation8], 1
    %1004 = vsyncpa %s1003, 1
    %1005 = vsyncpa [#allocation5], 1
    %s1006 = scalar_lea.sflag [#allocation5], 1
    %1007 = vsyncpa %s1006, 1
    %1008 = vsyncpa [#allocation6], 1
    %s1009 = scalar_lea.sflag [#allocation6], 1
    %1010 = vsyncpa %s1009, 1
    %1011 = vsyncpa [#allocation12], 1
    %1012 = vsyncpa [#allocation15], 1

</llo_original>
